<compile_context>
chip_gen: v7x
topology: tpu7x:2x2x1
jax: 0.10.0
libtpu: 0.0.40
codegen_flags: <defaults>
</compile_context>

<pallas_src>
import functools
import math

import jax
import jax.numpy as jnp
import numpy as np
from jax import lax
from jax.experimental import pallas as pl
from jax.experimental.pallas import tpu as pltpu


def _lstm2_wavefront_kernel(B, T, H,
                            x_ref, wih0_ref, b0_ref, w0_ref, w1_ref, b1_ref,
                            h_out_ref, c_out_ref,
                            xp_ref):
    """2-layer LSTM forward, single invocation (grid=()), wavefront schedule.

    x_ref:     (T*B, I)   time-major, rows [t*B,(t+1)*B) = step t
    wih0_ref:  (I, 4H)    layer-0 input weights (pre-transposed)
    b0_ref:    (1, 4H)    layer-0 bias
    w0_ref:    (H, 8H)    [whh0 | wih1]  -- both consumers of h0_{t-1}
    w1_ref:    (H, 4H)    whh1
    b1_ref:    (1, 4H)    layer-1 bias
    h_out_ref: (T*B, H)   layer-1 hidden sequence
    c_out_ref: (T*B, H)   layer-1 cell sequence
    xp_ref:    (T*B, 4H)  scratch: hoisted layer-0 input projection (+bias)
    """
    wdt = wih0_ref.dtype                  # MXU operand dtype (f32 or bf16)
    unroll = True if T <= 32 else 8
    H4 = 4 * H

    # Hoisted layer-0 input projection for ALL steps: one big MXU matmul,
    # bias folded in.
    # TODO(synk): for long sequences, chunk this over T and interleave chunk
    # k+1's projection matmul with the recurrence over chunk k.
    xp_ref[...] = jnp.dot(x_ref[...].astype(wdt), wih0_ref[...],
                          preferred_element_type=jnp.float32) + b0_ref[...]

    # Loop-invariant values hoisted out of the recurrence (JAX does not CSE
    # broadcast_in_dim inside loops).
    b1_full = jnp.broadcast_to(b1_ref[...].astype(jnp.float32), (B, H4))
    lane = lax.broadcasted_iota(jnp.int32, (B, H4), 1)
    g_mask = (lane >= 2 * H) & (lane < 3 * H)

    def cell(pre, c_prev):
        # Full-(B,4H)-tile transcendentals + lane-mask select instead of four
        # sub-lane-tile sigmoid/tanh calls: EUP ops stay full-width and no
        # per-gate relayout happens before the nonlinearity.
        act = jnp.where(g_mask, jnp.tanh(pre), jax.nn.sigmoid(pre))
        i = act[:, 0 * H:1 * H]
        f = act[:, 1 * H:2 * H]
        g = act[:, 2 * H:3 * H]
        o = act[:, 3 * H:4 * H]
        # TODO(synk): for H < 128 at scale, keep c replicated across the four
        # gate blocks and combine gates fully lane-packed via pltpu.roll so
        # the per-step elementwise chain has no masked/offset lane ops.
        c_new = f * c_prev + i * g
        h_new = o * jnp.tanh(c_new)
        return h_new, c_new

    zero = jnp.zeros((B, H), jnp.float32)

    # ---- prologue: layer-0 step 0 (h0_{-1}=c0_{-1}=0  =>  pre = xp[0]).
    h0, c0 = cell(xp_ref[pl.ds(0, B), :], zero)
    h1, c1 = zero, zero

    # ---- wavefront loop: iteration s does layer-0 step s & layer-1 step s-1.
    def step(s, carry):
        h0, c0, h1, c1 = carry
        # Two independent tiny matmuls (both read previous-iteration state);
        # they pipeline back-to-back on the MXU.
        z0 = jnp.dot(h0.astype(wdt), w0_ref[...],
                     preferred_element_type=jnp.float32)          # (B, 8H)
        z1 = jnp.dot(h1.astype(wdt), w1_ref[...],
                     preferred_element_type=jnp.float32)          # (B, 4H)

        row = pl.multiple_of(s * B, B)
        pre0 = xp_ref[pl.ds(row, B), :] + z0[:, :H4]     # layer 0, step s
        pre1 = b1_full + z0[:, H4:] + z1                 # layer 1, step s-1

        h0n, c0n = cell(pre0, c0)
        h1n, c1n = cell(pre1, c1)

        # Writeback of layer-1 step s-1 (off the recurrence critical path:
        # the next iteration only depends on the vreg-resident carries).
        prev = pl.multiple_of((s - 1) * B, B)
        h_out_ref[pl.ds(prev, B), :] = h1n
        c_out_ref[pl.ds(prev, B), :] = c1n
        return h0n, c0n, h1n, c1n

    h0, c0, h1, c1 = lax.fori_loop(1, T, step, (h0, c0, h1, c1),
                                   unroll=unroll)

    # ---- epilogue: layer-1 step T-1 (consumes h0_{T-1}, h1_{T-2}).
    z0 = jnp.dot(h0.astype(wdt), w0_ref[...],
                 preferred_element_type=jnp.float32)
    z1 = jnp.dot(h1.astype(wdt), w1_ref[...],
                 preferred_element_type=jnp.float32)
    pre1 = b1_full + z0[:, H4:] + z1
    h1, c1 = cell(pre1, c1)
    last = pl.multiple_of((T - 1) * B, B)
    h_out_ref[pl.ds(last, B), :] = h1
    c_out_ref[pl.ds(last, B), :] = c1


def rnnbase_lstm_forward(x_btc, params, *, weight_dtype=jnp.float32):
    """x_btc: (B, T, input_size) float32. Returns (h, c), each (B, T, H)."""
    B, T, I = x_btc.shape
    H = params["whh0"].shape[1]
    H4 = 4 * H

    # Pad batch to a sublane-tile multiple (8) so every per-step slab access
    # is an aligned full-sublane-tile load/store.
    Bp = ((B + 7) // 8) * 8
    if Bp != B:
        x_btc = jnp.pad(x_btc, ((0, Bp - B), (0, 0), (0, 0)))

    # time-major, flattened: rows [t*Bp, (t+1)*Bp) hold time step t.
    # TODO(synk): accept/emit time-major (T,B,*) directly at large sizes to
    # drop these two full-array HBM transpose passes outside the kernel.
    x_tb = jnp.transpose(x_btc, (1, 0, 2)).reshape(T * Bp, I)

    # F.linear(x, W) == x @ W.T  ->  pre-transpose once on the wrapper side.
    # MXU operands optionally in bf16 (bf16-native MXUs on v5e/v6e/v7x);
    # biases and all elementwise gate math stay f32.
    wih0 = params["wih0"].T.astype(weight_dtype)                    # (I, 4H)
    w0 = jnp.concatenate([params["whh0"].T, params["wih1"].T],
                         axis=1).astype(weight_dtype)               # (H, 8H)
    w1 = params["whh1"].T.astype(weight_dtype)                      # (H, 4H)
    b0 = params["b0"].reshape(1, H4).astype(jnp.float32)
    b1 = params["b1"].reshape(1, H4).astype(jnp.float32)

    # Explicit VMEM budget: resident slabs + weights + headroom (the scoped
    # default 16/32 MiB would reject moderately larger T*B*H).
    wbytes = jnp.dtype(weight_dtype).itemsize
    resident = (T * Bp * I * 4                      # x slab
                + T * Bp * H4 * 4                   # hoisted projection scratch
                + 2 * T * Bp * H * 4                # h / c output slabs
                + (I * H4 + H * 8 * H + H * H4) * wbytes   # weights
                + 2 * H4 * 4)                       # biases
    vmem_limit = min(max(int(resident * 2) + (4 << 20), 32 << 20), 100 << 20)
    # TODO(synk): when the slabs exceed this budget (esp. v7x's 64 MiB VMEM),
    # chunk x/xp over T (emit_pipeline / manual double-buffer) instead of
    # keeping full-sequence slabs resident; for B >= 16 on v7x add a
    # batch-parallel leading grid axis so both TensorCores are used.

    kernel = functools.partial(_lstm2_wavefront_kernel, Bp, T, H)
    vmem = pl.BlockSpec(memory_space=pltpu.MemorySpace.VMEM)

    h_flat, c_flat = pl.pallas_call(
        kernel,
        out_shape=(
            jax.ShapeDtypeStruct((T * Bp, H), jnp.float32),
            jax.ShapeDtypeStruct((T * Bp, H), jnp.float32),
        ),
        in_specs=[vmem] * 6,
        out_specs=(vmem, vmem),
        scratch_shapes=[
            pltpu.VMEM((T * Bp, H4), jnp.float32),   # hoisted input projection
        ],
        compiler_params=pltpu.CompilerParams(vmem_limit_bytes=vmem_limit),
    )(x_tb, wih0, b0, w0, w1, b1)

    # back to (B, T, H); drop batch padding.
    h = jnp.transpose(h_flat.reshape(T, Bp, H)[:, :B, :], (1, 0, 2))
    c = jnp.transpose(c_flat.reshape(T, Bp, H)[:, :B, :], (1, 0, 2))
    return h, c


def _reference_forward(x_btc, params):
    """Pure-JAX reference: 2-layer stack of LSTMCell.forward over time."""
    B, T, I = x_btc.shape
    H = params["whh0"].shape[1]

    def cell(x, h, c, wih, whh, b):
        pre = x @ wih.T + b + h @ whh.T
        i = jax.nn.sigmoid(pre[:, :H])
        f = jax.nn.sigmoid(pre[:, H:2 * H])
        g = jnp.tanh(pre[:, 2 * H:3 * H])
        o = jax.nn.sigmoid(pre[:, 3 * H:])
        c_new = f * c + i * g
        h_new = o * jnp.tanh(c_new)
        return h_new, c_new

    h0 = jnp.zeros((B, H), jnp.float32)
    c0 = jnp.zeros((B, H), jnp.float32)
    h1 = jnp.zeros((B, H), jnp.float32)
    c1 = jnp.zeros((B, H), jnp.float32)
    hs, cs = [], []
    for t in range(T):
        x = x_btc[:, t, :]
        h0, c0 = cell(x, h0, c0, params["wih0"], params["whh0"], params["b0"])
        h1, c1 = cell(h0, h1, c1, params["wih1"], params["whh1"], params["b1"])
        hs.append(h1)
        cs.append(c1)
    return jnp.stack(hs, axis=1), jnp.stack(cs, axis=1)


def _init_params(key, input_size, hidden_size):
    """reset_parameters: uniform(-stdv, stdv), stdv = 1/sqrt(hidden_size)."""
    stdv = 1.0 / math.sqrt(hidden_size)
    ks = jax.random.split(key, 6)
    u = lambda k, shape: jax.random.uniform(
        k, shape, jnp.float32, minval=-stdv, maxval=stdv)
    H, I = hidden_size, input_size
    return {
        # layer 0: input_size -> hidden_size
        "wih0": u(ks[0], (4 * H, I)),
        "whh0": u(ks[1], (4 * H, H)),
        "b0": u(ks[2], (4 * H,)),
        # layer 1: hidden_size -> hidden_size
        "wih1": u(ks[3], (4 * H, H)),
        "whh1": u(ks[4], (4 * H, H)),
        "b1": u(ks[5], (4 * H,)),
    }


if __name__ == "__main__":
    B, T, I, H = 8, 8, 16, 32   # B=8 -> one full sublane tile per step
    key = jax.random.PRNGKey(0)
    k_x, k_p = jax.random.split(key)

    x = jax.random.normal(k_x, (B, T, I), jnp.float32)
    params = _init_params(k_p, I, H)

    h_ref, c_ref = _reference_forward(x, params)

    # f32 MXU operands: strict check against the f32 reference.
    h_seq, c_seq = rnnbase_lstm_forward(x, params)
    jax.block_until_ready((h_seq, c_seq))
    np.testing.assert_allclose(np.asarray(h_seq), np.asarray(h_ref),
                               rtol=1e-5, atol=1e-5)
    np.testing.assert_allclose(np.asarray(c_seq), np.asarray(c_ref),
                               rtol=1e-5, atol=1e-5)

    # bf16 MXU operands (the recommended mode on v5e/v6e/v7x): looser check.
    h_bf, c_bf = rnnbase_lstm_forward(x, params, weight_dtype=jnp.bfloat16)
    jax.block_until_ready((h_bf, c_bf))
    np.testing.assert_allclose(np.asarray(h_bf), np.asarray(h_ref),
                               rtol=5e-2, atol=5e-2)
    np.testing.assert_allclose(np.asarray(c_bf), np.asarray(c_ref),
                               rtol=5e-2, atol=5e-2)

    assert h_seq.shape == (B, T, H) and c_seq.shape == (B, T, H)
    print("KERNEL_OK")
</pallas_src>

<mosaic_0001>
module attributes {stable_mosaic.version = 11 : i64} {
  func.func @_lstm2_wavefront_kernel(%arg0: memref<64x16xf32, #tpu.memory_space<vmem>>, %arg1: memref<16x128xf32, #tpu.memory_space<vmem>>, %arg2: memref<1x128xf32, #tpu.memory_space<vmem>>, %arg3: memref<32x256xf32, #tpu.memory_space<vmem>>, %arg4: memref<32x128xf32, #tpu.memory_space<vmem>>, %arg5: memref<1x128xf32, #tpu.memory_space<vmem>>, %arg6: memref<64x32xf32, #tpu.memory_space<vmem>>, %arg7: memref<64x32xf32, #tpu.memory_space<vmem>>, %arg8: memref<64x128xf32, #tpu.memory_space<vmem>>) attributes {dimension_semantics = [], scalar_prefetch = 0 : i64, scratch_operands = 1 : i64, tpu.core_type = #tpu.core_type<tc>} {
    %c0 = arith.constant 0 : index
    %c0_0 = arith.constant 0 : index
    %0 = vector.load %arg0[%c0, %c0_0] : memref<64x16xf32, #tpu.memory_space<vmem>>, vector<64x16xf32>
    %c0_1 = arith.constant 0 : index
    %c0_2 = arith.constant 0 : index
    %1 = vector.load %arg1[%c0_1, %c0_2] : memref<16x128xf32, #tpu.memory_space<vmem>>, vector<16x128xf32>
    %cst = arith.constant dense<0.000000e+00> : vector<64x128xf32>
    %2 = tpu.matmul %0, %1, %cst {dimension_numbers = #tpu.dot_dimension_numbers<[1], [0], [0], [1], [0, 0, 1, 1], [], []>} : vector<64x16xf32>, vector<16x128xf32>, vector<64x128xf32> -> vector<64x128xf32>
    %c0_3 = arith.constant 0 : index
    %c0_4 = arith.constant 0 : index
    %3 = vector.load %arg2[%c0_3, %c0_4] : memref<1x128xf32, #tpu.memory_space<vmem>>, vector<1x128xf32>
    %4 = vector.broadcast %3 : vector<1x128xf32> to vector<64x128xf32>
    %5 = arith.addf %2, %4 : vector<64x128xf32>
    %c0_5 = arith.constant 0 : index
    %c0_6 = arith.constant 0 : index
    %6 = vector.load %arg8[%c0_5, %c0_6] : memref<64x128xf32, #tpu.memory_space<vmem>>, vector<64x128xf32>
    tpu.vector_store %arg8[%c0_5, %c0_6], %5 {strides = array<i32>} : memref<64x128xf32, #tpu.memory_space<vmem>>, vector<64x128xf32>,
    %c0_7 = arith.constant 0 : index
    %c0_8 = arith.constant 0 : index
    %7 = vector.load %arg5[%c0_7, %c0_8] : memref<1x128xf32, #tpu.memory_space<vmem>>, vector<1x128xf32>
    %8 = vector.shape_cast %7 : vector<1x128xf32> to vector<1x128xf32>
    %9 = vector.broadcast %8 : vector<1x128xf32> to vector<8x128xf32>
    %10 = tpu.iota {dimensions = array<i32: 1>} : vector<8x128xi32>
    %c64_i32 = arith.constant 64 : i32
    %11 = vector.broadcast %c64_i32 : i32 to vector<8x128xi32>
    %12 = arith.cmpi sge, %10, %11 : vector<8x128xi32>
    %c96_i32 = arith.constant 96 : i32
    %13 = vector.broadcast %c96_i32 : i32 to vector<8x128xi32>
    %14 = arith.cmpi slt, %10, %13 : vector<8x128xi32>
    %15 = arith.andi %12, %14 : vector<8x128xi1>
    %cst_9 = arith.constant 0.000000e+00 : f32
    %16 = vector.broadcast %cst_9 : f32 to vector<8x32xf32>
    %c0_10 = arith.constant 0 : index
    %c0_11 = arith.constant 0 : index
    %17 = vector.load %arg8[%c0_10, %c0_11] : memref<64x128xf32, #tpu.memory_space<vmem>>, vector<8x128xf32>
    %18 = math.tanh %17 : vector<8x128xf32>
    %19 = arith.negf %17 : vector<8x128xf32>
    %20 = math.exp %19 : vector<8x128xf32>
    %cst_12 = arith.constant 1.000000e+00 : f32
    %21 = vector.broadcast %cst_12 : f32 to vector<8x128xf32>
    %22 = arith.addf %21, %20 : vector<8x128xf32>
    %23 = arith.divf %21, %22 : vector<8x128xf32>
    %24 = arith.select %15, %18, %23 : vector<8x128xi1>, vector<8x128xf32>
    %25 = vector.extract_strided_slice %24 {offsets = [0, 0], sizes = [8, 32], strides = [1, 1]} : vector<8x128xf32> to vector<8x32xf32>
    %26 = vector.extract_strided_slice %24 {offsets = [0, 32], sizes = [8, 32], strides = [1, 1]} : vector<8x128xf32> to vector<8x32xf32>
    %27 = vector.extract_strided_slice %24 {offsets = [0, 64], sizes = [8, 32], strides = [1, 1]} : vector<8x128xf32> to vector<8x32xf32>
    %28 = vector.extract_strided_slice %24 {offsets = [0, 96], sizes = [8, 32], strides = [1, 1]} : vector<8x128xf32> to vector<8x32xf32>
    %29 = arith.mulf %26, %16 : vector<8x32xf32>
    %30 = arith.mulf %25, %27 : vector<8x32xf32>
    %31 = arith.addf %29, %30 : vector<8x32xf32>
    %32 = math.tanh %31 : vector<8x32xf32>
    %33 = arith.mulf %28, %32 : vector<8x32xf32>
    %c1_i32 = arith.constant 1 : i32
    %c0_13 = arith.constant 0 : index
    %c0_14 = arith.constant 0 : index
    %34 = vector.load %arg3[%c0_13, %c0_14] : memref<32x256xf32, #tpu.memory_space<vmem>>, vector<32x256xf32>
    %cst_15 = arith.constant dense<0.000000e+00> : vector<8x256xf32>
    %35 = tpu.matmul %33, %34, %cst_15 {dimension_numbers = #tpu.dot_dimension_numbers<[1], [0], [0], [1], [0, 0, 1, 1], [], []>} : vector<8x32xf32>, vector<32x256xf32>, vector<8x256xf32> -> vector<8x256xf32>
    %c0_16 = arith.constant 0 : index
    %c0_17 = arith.constant 0 : index
    %36 = vector.load %arg4[%c0_16, %c0_17] : memref<32x128xf32, #tpu.memory_space<vmem>>, vector<32x128xf32>
    %cst_18 = arith.constant dense<0.000000e+00> : vector<8x128xf32>
    %37 = tpu.matmul %16, %36, %cst_18 {dimension_numbers = #tpu.dot_dimension_numbers<[1], [0], [0], [1], [0, 0, 1, 1], [], []>} : vector<8x32xf32>, vector<32x128xf32>, vector<8x128xf32> -> vector<8x128xf32>
    %c8_i32 = arith.constant 8 : i32
    %38 = arith.muli %c1_i32, %c8_i32 : i32
    %39 = tpu.assume_multiple %38, 8 : i32
    %40 = arith.index_cast %39 : i32 to index
    %c0_19 = arith.constant 0 : index
    %41 = vector.load %arg8[%40, %c0_19] : memref<64x128xf32, #tpu.memory_space<vmem>>, vector<8x128xf32>
    %42 = vector.extract_strided_slice %35 {offsets = [0, 0], sizes = [8, 128], strides = [1, 1]} : vector<8x256xf32> to vector<8x128xf32>
    %43 = arith.addf %41, %42 : vector<8x128xf32>
    %44 = vector.extract_strided_slice %35 {offsets = [0, 128], sizes = [8, 128], strides = [1, 1]} : vector<8x256xf32> to vector<8x128xf32>
    %45 = arith.addf %9, %44 : vector<8x128xf32>
    %46 = arith.addf %45, %37 : vector<8x128xf32>
    %47 = math.tanh %43 : vector<8x128xf32>
    %48 = arith.negf %43 : vector<8x128xf32>
    %49 = math.exp %48 : vector<8x128xf32>
    %cst_20 = arith.constant 1.000000e+00 : f32
    %50 = vector.broadcast %cst_20 : f32 to vector<8x128xf32>
    %51 = arith.addf %50, %49 : vector<8x128xf32>
    %52 = arith.divf %50, %51 : vector<8x128xf32>
    %53 = arith.select %15, %47, %52 : vector<8x128xi1>, vector<8x128xf32>
    %54 = vector.extract_strided_slice %53 {offsets = [0, 0], sizes = [8, 32], strides = [1, 1]} : vector<8x128xf32> to vector<8x32xf32>
    %55 = vector.extract_strided_slice %53 {offsets = [0, 32], sizes = [8, 32], strides = [1, 1]} : vector<8x128xf32> to vector<8x32xf32>
    %56 = vector.extract_strided_slice %53 {offsets = [0, 64], sizes = [8, 32], strides = [1, 1]} : vector<8x128xf32> to vector<8x32xf32>
    %57 = vector.extract_strided_slice %53 {offsets = [0, 96], sizes = [8, 32], strides = [1, 1]} : vector<8x128xf32> to vector<8x32xf32>
    %58 = arith.mulf %55, %31 : vector<8x32xf32>
    %59 = arith.mulf %54, %56 : vector<8x32xf32>
    %60 = arith.addf %58, %59 : vector<8x32xf32>
    %61 = math.tanh %60 : vector<8x32xf32>
    %62 = arith.mulf %57, %61 : vector<8x32xf32>
    %63 = math.tanh %46 : vector<8x128xf32>
    %64 = arith.negf %46 : vector<8x128xf32>
    %65 = math.exp %64 : vector<8x128xf32>
    %cst_21 = arith.constant 1.000000e+00 : f32
    %66 = vector.broadcast %cst_21 : f32 to vector<8x128xf32>
    %67 = arith.addf %66, %65 : vector<8x128xf32>
    %68 = arith.divf %66, %67 : vector<8x128xf32>
    %69 = arith.select %15, %63, %68 : vector<8x128xi1>, vector<8x128xf32>
    %70 = vector.extract_strided_slice %69 {offsets = [0, 0], sizes = [8, 32], strides = [1, 1]} : vector<8x128xf32> to vector<8x32xf32>
    %71 = vector.extract_strided_slice %69 {offsets = [0, 32], sizes = [8, 32], strides = [1, 1]} : vector<8x128xf32> to vector<8x32xf32>
    %72 = vector.extract_strided_slice %69 {offsets = [0, 64], sizes = [8, 32], strides = [1, 1]} : vector<8x128xf32> to vector<8x32xf32>
    %73 = vector.extract_strided_slice %69 {offsets = [0, 96], sizes = [8, 32], strides = [1, 1]} : vector<8x128xf32> to vector<8x32xf32>
    %74 = arith.mulf %71, %16 : vector<8x32xf32>
    %75 = arith.mulf %70, %72 : vector<8x32xf32>
    %76 = arith.addf %74, %75 : vector<8x32xf32>
    %77 = math.tanh %76 : vector<8x32xf32>
    %78 = arith.mulf %73, %77 : vector<8x32xf32>
    %c1_i32_22 = arith.constant 1 : i32
    %79 = arith.subi %c1_i32, %c1_i32_22 : i32
    %c8_i32_23 = arith.constant 8 : i32
    %80 = arith.muli %79, %c8_i32_23 : i32
    %81 = tpu.assume_multiple %80, 8 : i32
    %82 = arith.index_cast %81 : i32 to index
    %c0_24 = arith.constant 0 : index
    %83 = vector.load %arg6[%82, %c0_24] : memref<64x32xf32, #tpu.memory_space<vmem>>, vector<8x32xf32>
    tpu.vector_store %arg6[%82, %c0_24], %78 {strides = array<i32>} : memref<64x32xf32, #tpu.memory_space<vmem>>, vector<8x32xf32>,
    %84 = arith.index_cast %81 : i32 to index
    %c0_25 = arith.constant 0 : index
    %85 = vector.load %arg7[%84, %c0_25] : memref<64x32xf32, #tpu.memory_space<vmem>>, vector<8x32xf32>
    tpu.vector_store %arg7[%84, %c0_25], %76 {strides = array<i32>} : memref<64x32xf32, #tpu.memory_space<vmem>>, vector<8x32xf32>,
    %c2_i32 = arith.constant 2 : i32
    %c0_26 = arith.constant 0 : index
    %c0_27 = arith.constant 0 : index
    %86 = vector.load %arg3[%c0_26, %c0_27] : memref<32x256xf32, #tpu.memory_space<vmem>>, vector<32x256xf32>
    %cst_28 = arith.constant dense<0.000000e+00> : vector<8x256xf32>
    %87 = tpu.matmul %62, %86, %cst_28 {dimension_numbers = #tpu.dot_dimension_numbers<[1], [0], [0], [1], [0, 0, 1, 1], [], []>} : vector<8x32xf32>, vector<32x256xf32>, vector<8x256xf32> -> vector<8x256xf32>
    %c0_29 = arith.constant 0 : index
    %c0_30 = arith.constant 0 : index
    %88 = vector.load %arg4[%c0_29, %c0_30] : memref<32x128xf32, #tpu.memory_space<vmem>>, vector<32x128xf32>
    %cst_31 = arith.constant dense<0.000000e+00> : vector<8x128xf32>
    %89 = tpu.matmul %78, %88, %cst_31 {dimension_numbers = #tpu.dot_dimension_numbers<[1], [0], [0], [1], [0, 0, 1, 1], [], []>} : vector<8x32xf32>, vector<32x128xf32>, vector<8x128xf32> -> vector<8x128xf32>
    %c8_i32_32 = arith.constant 8 : i32
    %90 = arith.muli %c2_i32, %c8_i32_32 : i32
    %91 = tpu.assume_multiple %90, 8 : i32
    %92 = arith.index_cast %91 : i32 to index
    %c0_33 = arith.constant 0 : index
    %93 = vector.load %arg8[%92, %c0_33] : memref<64x128xf32, #tpu.memory_space<vmem>>, vector<8x128xf32>
    %94 = vector.extract_strided_slice %87 {offsets = [0, 0], sizes = [8, 128], strides = [1, 1]} : vector<8x256xf32> to vector<8x128xf32>
    %95 = arith.addf %93, %94 : vector<8x128xf32>
    %96 = vector.extract_strided_slice %87 {offsets = [0, 128], sizes = [8, 128], strides = [1, 1]} : vector<8x256xf32> to vector<8x128xf32>
    %97 = arith.addf %9, %96 : vector<8x128xf32>
    %98 = arith.addf %97, %89 : vector<8x128xf32>
    %99 = math.tanh %95 : vector<8x128xf32>
    %100 = arith.negf %95 : vector<8x128xf32>
    %101 = math.exp %100 : vector<8x128xf32>
    %cst_34 = arith.constant 1.000000e+00 : f32
    %102 = vector.broadcast %cst_34 : f32 to vector<8x128xf32>
    %103 = arith.addf %102, %101 : vector<8x128xf32>
    %104 = arith.divf %102, %103 : vector<8x128xf32>
    %105 = arith.select %15, %99, %104 : vector<8x128xi1>, vector<8x128xf32>
    %106 = vector.extract_strided_slice %105 {offsets = [0, 0], sizes = [8, 32], strides = [1, 1]} : vector<8x128xf32> to vector<8x32xf32>
    %107 = vector.extract_strided_slice %105 {offsets = [0, 32], sizes = [8, 32], strides = [1, 1]} : vector<8x128xf32> to vector<8x32xf32>
    %108 = vector.extract_strided_slice %105 {offsets = [0, 64], sizes = [8, 32], strides = [1, 1]} : vector<8x128xf32> to vector<8x32xf32>
    %109 = vector.extract_strided_slice %105 {offsets = [0, 96], sizes = [8, 32], strides = [1, 1]} : vector<8x128xf32> to vector<8x32xf32>
    %110 = arith.mulf %107, %60 : vector<8x32xf32>
    %111 = arith.mulf %106, %108 : vector<8x32xf32>
    %112 = arith.addf %110, %111 : vector<8x32xf32>
    %113 = math.tanh %112 : vector<8x32xf32>
    %114 = arith.mulf %109, %113 : vector<8x32xf32>
    %115 = math.tanh %98 : vector<8x128xf32>
    %116 = arith.negf %98 : vector<8x128xf32>
    %117 = math.exp %116 : vector<8x128xf32>
    %cst_35 = arith.constant 1.000000e+00 : f32
    %118 = vector.broadcast %cst_35 : f32 to vector<8x128xf32>
    %119 = arith.addf %118, %117 : vector<8x128xf32>
    %120 = arith.divf %118, %119 : vector<8x128xf32>
    %121 = arith.select %15, %115, %120 : vector<8x128xi1>, vector<8x128xf32>
    %122 = vector.extract_strided_slice %121 {offsets = [0, 0], sizes = [8, 32], strides = [1, 1]} : vector<8x128xf32> to vector<8x32xf32>
    %123 = vector.extract_strided_slice %121 {offsets = [0, 32], sizes = [8, 32], strides = [1, 1]} : vector<8x128xf32> to vector<8x32xf32>
    %124 = vector.extract_strided_slice %121 {offsets = [0, 64], sizes = [8, 32], strides = [1, 1]} : vector<8x128xf32> to vector<8x32xf32>
    %125 = vector.extract_strided_slice %121 {offsets = [0, 96], sizes = [8, 32], strides = [1, 1]} : vector<8x128xf32> to vector<8x32xf32>
    %126 = arith.mulf %123, %76 : vector<8x32xf32>
    %127 = arith.mulf %122, %124 : vector<8x32xf32>
    %128 = arith.addf %126, %127 : vector<8x32xf32>
    %129 = math.tanh %128 : vector<8x32xf32>
    %130 = arith.mulf %125, %129 : vector<8x32xf32>
    %c1_i32_36 = arith.constant 1 : i32
    %131 = arith.subi %c2_i32, %c1_i32_36 : i32
    %c8_i32_37 = arith.constant 8 : i32
    %132 = arith.muli %131, %c8_i32_37 : i32
    %133 = tpu.assume_multiple %132, 8 : i32
    %134 = arith.index_cast %133 : i32 to index
    %c0_38 = arith.constant 0 : index
    %135 = vector.load %arg6[%134, %c0_38] : memref<64x32xf32, #tpu.memory_space<vmem>>, vector<8x32xf32>
    tpu.vector_store %arg6[%134, %c0_38], %130 {strides = array<i32>} : memref<64x32xf32, #tpu.memory_space<vmem>>, vector<8x32xf32>,
    %136 = arith.index_cast %133 : i32 to index
    %c0_39 = arith.constant 0 : index
    %137 = vector.load %arg7[%136, %c0_39] : memref<64x32xf32, #tpu.memory_space<vmem>>, vector<8x32xf32>
    tpu.vector_store %arg7[%136, %c0_39], %128 {strides = array<i32>} : memref<64x32xf32, #tpu.memory_space<vmem>>, vector<8x32xf32>,
    %c3_i32 = arith.constant 3 : i32
    %c0_40 = arith.constant 0 : index
    %c0_41 = arith.constant 0 : index
    %138 = vector.load %arg3[%c0_40, %c0_41] : memref<32x256xf32, #tpu.memory_space<vmem>>, vector<32x256xf32>
    %cst_42 = arith.constant dense<0.000000e+00> : vector<8x256xf32>
    %139 = tpu.matmul %114, %138, %cst_42 {dimension_numbers = #tpu.dot_dimension_numbers<[1], [0], [0], [1], [0, 0, 1, 1], [], []>} : vector<8x32xf32>, vector<32x256xf32>, vector<8x256xf32> -> vector<8x256xf32>
    %c0_43 = arith.constant 0 : index
    %c0_44 = arith.constant 0 : index
    %140 = vector.load %arg4[%c0_43, %c0_44] : memref<32x128xf32, #tpu.memory_space<vmem>>, vector<32x128xf32>
    %cst_45 = arith.constant dense<0.000000e+00> : vector<8x128xf32>
    %141 = tpu.matmul %130, %140, %cst_45 {dimension_numbers = #tpu.dot_dimension_numbers<[1], [0], [0], [1], [0, 0, 1, 1], [], []>} : vector<8x32xf32>, vector<32x128xf32>, vector<8x128xf32> -> vector<8x128xf32>
    %c8_i32_46 = arith.constant 8 : i32
    %142 = arith.muli %c3_i32, %c8_i32_46 : i32
    %143 = tpu.assume_multiple %142, 8 : i32
    %144 = arith.index_cast %143 : i32 to index
    %c0_47 = arith.constant 0 : index
    %145 = vector.load %arg8[%144, %c0_47] : memref<64x128xf32, #tpu.memory_space<vmem>>, vector<8x128xf32>
    %146 = vector.extract_strided_slice %139 {offsets = [0, 0], sizes = [8, 128], strides = [1, 1]} : vector<8x256xf32> to vector<8x128xf32>
    %147 = arith.addf %145, %146 : vector<8x128xf32>
    %148 = vector.extract_strided_slice %139 {offsets = [0, 128], sizes = [8, 128], strides = [1, 1]} : vector<8x256xf32> to vector<8x128xf32>
    %149 = arith.addf %9, %148 : vector<8x128xf32>
    %150 = arith.addf %149, %141 : vector<8x128xf32>
    %151 = math.tanh %147 : vector<8x128xf32>
    %152 = arith.negf %147 : vector<8x128xf32>
    %153 = math.exp %152 : vector<8x128xf32>
    %cst_48 = arith.constant 1.000000e+00 : f32
    %154 = vector.broadcast %cst_48 : f32 to vector<8x128xf32>
    %155 = arith.addf %154, %153 : vector<8x128xf32>
    %156 = arith.divf %154, %155 : vector<8x128xf32>
    %157 = arith.select %15, %151, %156 : vector<8x128xi1>, vector<8x128xf32>
    %158 = vector.extract_strided_slice %157 {offsets = [0, 0], sizes = [8, 32], strides = [1, 1]} : vector<8x128xf32> to vector<8x32xf32>
    %159 = vector.extract_strided_slice %157 {offsets = [0, 32], sizes = [8, 32], strides = [1, 1]} : vector<8x128xf32> to vector<8x32xf32>
    %160 = vector.extract_strided_slice %157 {offsets = [0, 64], sizes = [8, 32], strides = [1, 1]} : vector<8x128xf32> to vector<8x32xf32>
    %161 = vector.extract_strided_slice %157 {offsets = [0, 96], sizes = [8, 32], strides = [1, 1]} : vector<8x128xf32> to vector<8x32xf32>
    %162 = arith.mulf %159, %112 : vector<8x32xf32>
    %163 = arith.mulf %158, %160 : vector<8x32xf32>
    %164 = arith.addf %162, %163 : vector<8x32xf32>
    %165 = math.tanh %164 : vector<8x32xf32>
    %166 = arith.mulf %161, %165 : vector<8x32xf32>
    %167 = math.tanh %150 : vector<8x128xf32>
    %168 = arith.negf %150 : vector<8x128xf32>
    %169 = math.exp %168 : vector<8x128xf32>
    %cst_49 = arith.constant 1.000000e+00 : f32
    %170 = vector.broadcast %cst_49 : f32 to vector<8x128xf32>
    %171 = arith.addf %170, %169 : vector<8x128xf32>
    %172 = arith.divf %170, %171 : vector<8x128xf32>
    %173 = arith.select %15, %167, %172 : vector<8x128xi1>, vector<8x128xf32>
    %174 = vector.extract_strided_slice %173 {offsets = [0, 0], sizes = [8, 32], strides = [1, 1]} : vector<8x128xf32> to vector<8x32xf32>
    %175 = vector.extract_strided_slice %173 {offsets = [0, 32], sizes = [8, 32], strides = [1, 1]} : vector<8x128xf32> to vector<8x32xf32>
    %176 = vector.extract_strided_slice %173 {offsets = [0, 64], sizes = [8, 32], strides = [1, 1]} : vector<8x128xf32> to vector<8x32xf32>
    %177 = vector.extract_strided_slice %173 {offsets = [0, 96], sizes = [8, 32], strides = [1, 1]} : vector<8x128xf32> to vector<8x32xf32>
    %178 = arith.mulf %175, %128 : vector<8x32xf32>
    %179 = arith.mulf %174, %176 : vector<8x32xf32>
    %180 = arith.addf %178, %179 : vector<8x32xf32>
    %181 = math.tanh %180 : vector<8x32xf32>
    %182 = arith.mulf %177, %181 : vector<8x32xf32>
    %c1_i32_50 = arith.constant 1 : i32
    %183 = arith.subi %c3_i32, %c1_i32_50 : i32
    %c8_i32_51 = arith.constant 8 : i32
    %184 = arith.muli %183, %c8_i32_51 : i32
    %185 = tpu.assume_multiple %184, 8 : i32
    %186 = arith.index_cast %185 : i32 to index
    %c0_52 = arith.constant 0 : index
    %187 = vector.load %arg6[%186, %c0_52] : memref<64x32xf32, #tpu.memory_space<vmem>>, vector<8x32xf32>
    tpu.vector_store %arg6[%186, %c0_52], %182 {strides = array<i32>} : memref<64x32xf32, #tpu.memory_space<vmem>>, vector<8x32xf32>,
    %188 = arith.index_cast %185 : i32 to index
    %c0_53 = arith.constant 0 : index
    %189 = vector.load %arg7[%188, %c0_53] : memref<64x32xf32, #tpu.memory_space<vmem>>, vector<8x32xf32>
    tpu.vector_store %arg7[%188, %c0_53], %180 {strides = array<i32>} : memref<64x32xf32, #tpu.memory_space<vmem>>, vector<8x32xf32>,
    %c4_i32 = arith.constant 4 : i32
    %c0_54 = arith.constant 0 : index
    %c0_55 = arith.constant 0 : index
    %190 = vector.load %arg3[%c0_54, %c0_55] : memref<32x256xf32, #tpu.memory_space<vmem>>, vector<32x256xf32>
    %cst_56 = arith.constant dense<0.000000e+00> : vector<8x256xf32>
    %191 = tpu.matmul %166, %190, %cst_56 {dimension_numbers = #tpu.dot_dimension_numbers<[1], [0], [0], [1], [0, 0, 1, 1], [], []>} : vector<8x32xf32>, vector<32x256xf32>, vector<8x256xf32> -> vector<8x256xf32>
    %c0_57 = arith.constant 0 : index
    %c0_58 = arith.constant 0 : index
    %192 = vector.load %arg4[%c0_57, %c0_58] : memref<32x128xf32, #tpu.memory_space<vmem>>, vector<32x128xf32>
    %cst_59 = arith.constant dense<0.000000e+00> : vector<8x128xf32>
    %193 = tpu.matmul %182, %192, %cst_59 {dimension_numbers = #tpu.dot_dimension_numbers<[1], [0], [0], [1], [0, 0, 1, 1], [], []>} : vector<8x32xf32>, vector<32x128xf32>, vector<8x128xf32> -> vector<8x128xf32>
    %c8_i32_60 = arith.constant 8 : i32
    %194 = arith.muli %c4_i32, %c8_i32_60 : i32
    %195 = tpu.assume_multiple %194, 8 : i32
    %196 = arith.index_cast %195 : i32 to index
    %c0_61 = arith.constant 0 : index
    %197 = vector.load %arg8[%196, %c0_61] : memref<64x128xf32, #tpu.memory_space<vmem>>, vector<8x128xf32>
    %198 = vector.extract_strided_slice %191 {offsets = [0, 0], sizes = [8, 128], strides = [1, 1]} : vector<8x256xf32> to vector<8x128xf32>
    %199 = arith.addf %197, %198 : vector<8x128xf32>
    %200 = vector.extract_strided_slice %191 {offsets = [0, 128], sizes = [8, 128], strides = [1, 1]} : vector<8x256xf32> to vector<8x128xf32>
    %201 = arith.addf %9, %200 : vector<8x128xf32>
    %202 = arith.addf %201, %193 : vector<8x128xf32>
    %203 = math.tanh %199 : vector<8x128xf32>
    %204 = arith.negf %199 : vector<8x128xf32>
    %205 = math.exp %204 : vector<8x128xf32>
    %cst_62 = arith.constant 1.000000e+00 : f32
    %206 = vector.broadcast %cst_62 : f32 to vector<8x128xf32>
    %207 = arith.addf %206, %205 : vector<8x128xf32>
    %208 = arith.divf %206, %207 : vector<8x128xf32>
    %209 = arith.select %15, %203, %208 : vector<8x128xi1>, vector<8x128xf32>
    %210 = vector.extract_strided_slice %209 {offsets = [0, 0], sizes = [8, 32], strides = [1, 1]} : vector<8x128xf32> to vector<8x32xf32>
    %211 = vector.extract_strided_slice %209 {offsets = [0, 32], sizes = [8, 32], strides = [1, 1]} : vector<8x128xf32> to vector<8x32xf32>
    %212 = vector.extract_strided_slice %209 {offsets = [0, 64], sizes = [8, 32], strides = [1, 1]} : vector<8x128xf32> to vector<8x32xf32>
    %213 = vector.extract_strided_slice %209 {offsets = [0, 96], sizes = [8, 32], strides = [1, 1]} : vector<8x128xf32> to vector<8x32xf32>
    %214 = arith.mulf %211, %164 : vector<8x32xf32>
    %215 = arith.mulf %210, %212 : vector<8x32xf32>
    %216 = arith.addf %214, %215 : vector<8x32xf32>
    %217 = math.tanh %216 : vector<8x32xf32>
    %218 = arith.mulf %213, %217 : vector<8x32xf32>
    %219 = math.tanh %202 : vector<8x128xf32>
    %220 = arith.negf %202 : vector<8x128xf32>
    %221 = math.exp %220 : vector<8x128xf32>
    %cst_63 = arith.constant 1.000000e+00 : f32
    %222 = vector.broadcast %cst_63 : f32 to vector<8x128xf32>
    %223 = arith.addf %222, %221 : vector<8x128xf32>
    %224 = arith.divf %222, %223 : vector<8x128xf32>
    %225 = arith.select %15, %219, %224 : vector<8x128xi1>, vector<8x128xf32>
    %226 = vector.extract_strided_slice %225 {offsets = [0, 0], sizes = [8, 32], strides = [1, 1]} : vector<8x128xf32> to vector<8x32xf32>
    %227 = vector.extract_strided_slice %225 {offsets = [0, 32], sizes = [8, 32], strides = [1, 1]} : vector<8x128xf32> to vector<8x32xf32>
    %228 = vector.extract_strided_slice %225 {offsets = [0, 64], sizes = [8, 32], strides = [1, 1]} : vector<8x128xf32> to vector<8x32xf32>
    %229 = vector.extract_strided_slice %225 {offsets = [0, 96], sizes = [8, 32], strides = [1, 1]} : vector<8x128xf32> to vector<8x32xf32>
    %230 = arith.mulf %227, %180 : vector<8x32xf32>
    %231 = arith.mulf %226, %228 : vector<8x32xf32>
    %232 = arith.addf %230, %231 : vector<8x32xf32>
    %233 = math.tanh %232 : vector<8x32xf32>
    %234 = arith.mulf %229, %233 : vector<8x32xf32>
    %c1_i32_64 = arith.constant 1 : i32
    %235 = arith.subi %c4_i32, %c1_i32_64 : i32
    %c8_i32_65 = arith.constant 8 : i32
    %236 = arith.muli %235, %c8_i32_65 : i32
    %237 = tpu.assume_multiple %236, 8 : i32
    %238 = arith.index_cast %237 : i32 to index
    %c0_66 = arith.constant 0 : index
    %239 = vector.load %arg6[%238, %c0_66] : memref<64x32xf32, #tpu.memory_space<vmem>>, vector<8x32xf32>
    tpu.vector_store %arg6[%238, %c0_66], %234 {strides = array<i32>} : memref<64x32xf32, #tpu.memory_space<vmem>>, vector<8x32xf32>,
    %240 = arith.index_cast %237 : i32 to index
    %c0_67 = arith.constant 0 : index
    %241 = vector.load %arg7[%240, %c0_67] : memref<64x32xf32, #tpu.memory_space<vmem>>, vector<8x32xf32>
    tpu.vector_store %arg7[%240, %c0_67], %232 {strides = array<i32>} : memref<64x32xf32, #tpu.memory_space<vmem>>, vector<8x32xf32>,
    %c5_i32 = arith.constant 5 : i32
    %c0_68 = arith.constant 0 : index
    %c0_69 = arith.constant 0 : index
    %242 = vector.load %arg3[%c0_68, %c0_69] : memref<32x256xf32, #tpu.memory_space<vmem>>, vector<32x256xf32>
    %cst_70 = arith.constant dense<0.000000e+00> : vector<8x256xf32>
    %243 = tpu.matmul %218, %242, %cst_70 {dimension_numbers = #tpu.dot_dimension_numbers<[1], [0], [0], [1], [0, 0, 1, 1], [], []>} : vector<8x32xf32>, vector<32x256xf32>, vector<8x256xf32> -> vector<8x256xf32>
    %c0_71 = arith.constant 0 : index
    %c0_72 = arith.constant 0 : index
    %244 = vector.load %arg4[%c0_71, %c0_72] : memref<32x128xf32, #tpu.memory_space<vmem>>, vector<32x128xf32>
    %cst_73 = arith.constant dense<0.000000e+00> : vector<8x128xf32>
    %245 = tpu.matmul %234, %244, %cst_73 {dimension_numbers = #tpu.dot_dimension_numbers<[1], [0], [0], [1], [0, 0, 1, 1], [], []>} : vector<8x32xf32>, vector<32x128xf32>, vector<8x128xf32> -> vector<8x128xf32>
    %c8_i32_74 = arith.constant 8 : i32
    %246 = arith.muli %c5_i32, %c8_i32_74 : i32
    %247 = tpu.assume_multiple %246, 8 : i32
    %248 = arith.index_cast %247 : i32 to index
    %c0_75 = arith.constant 0 : index
    %249 = vector.load %arg8[%248, %c0_75] : memref<64x128xf32, #tpu.memory_space<vmem>>, vector<8x128xf32>
    %250 = vector.extract_strided_slice %243 {offsets = [0, 0], sizes = [8, 128], strides = [1, 1]} : vector<8x256xf32> to vector<8x128xf32>
    %251 = arith.addf %249, %250 : vector<8x128xf32>
    %252 = vector.extract_strided_slice %243 {offsets = [0, 128], sizes = [8, 128], strides = [1, 1]} : vector<8x256xf32> to vector<8x128xf32>
    %253 = arith.addf %9, %252 : vector<8x128xf32>
    %254 = arith.addf %253, %245 : vector<8x128xf32>
    %255 = math.tanh %251 : vector<8x128xf32>
    %256 = arith.negf %251 : vector<8x128xf32>
    %257 = math.exp %256 : vector<8x128xf32>
    %cst_76 = arith.constant 1.000000e+00 : f32
    %258 = vector.broadcast %cst_76 : f32 to vector<8x128xf32>
    %259 = arith.addf %258, %257 : vector<8x128xf32>
    %260 = arith.divf %258, %259 : vector<8x128xf32>
    %261 = arith.select %15, %255, %260 : vector<8x128xi1>, vector<8x128xf32>
    %262 = vector.extract_strided_slice %261 {offsets = [0, 0], sizes = [8, 32], strides = [1, 1]} : vector<8x128xf32> to vector<8x32xf32>
    %263 = vector.extract_strided_slice %261 {offsets = [0, 32], sizes = [8, 32], strides = [1, 1]} : vector<8x128xf32> to vector<8x32xf32>
    %264 = vector.extract_strided_slice %261 {offsets = [0, 64], sizes = [8, 32], strides = [1, 1]} : vector<8x128xf32> to vector<8x32xf32>
    %265 = vector.extract_strided_slice %261 {offsets = [0, 96], sizes = [8, 32], strides = [1, 1]} : vector<8x128xf32> to vector<8x32xf32>
    %266 = arith.mulf %263, %216 : vector<8x32xf32>
    %267 = arith.mulf %262, %264 : vector<8x32xf32>
    %268 = arith.addf %266, %267 : vector<8x32xf32>
    %269 = math.tanh %268 : vector<8x32xf32>
    %270 = arith.mulf %265, %269 : vector<8x32xf32>
    %271 = math.tanh %254 : vector<8x128xf32>
    %272 = arith.negf %254 : vector<8x128xf32>
    %273 = math.exp %272 : vector<8x128xf32>
    %cst_77 = arith.constant 1.000000e+00 : f32
    %274 = vector.broadcast %cst_77 : f32 to vector<8x128xf32>
    %275 = arith.addf %274, %273 : vector<8x128xf32>
    %276 = arith.divf %274, %275 : vector<8x128xf32>
    %277 = arith.select %15, %271, %276 : vector<8x128xi1>, vector<8x128xf32>
    %278 = vector.extract_strided_slice %277 {offsets = [0, 0], sizes = [8, 32], strides = [1, 1]} : vector<8x128xf32> to vector<8x32xf32>
    %279 = vector.extract_strided_slice %277 {offsets = [0, 32], sizes = [8, 32], strides = [1, 1]} : vector<8x128xf32> to vector<8x32xf32>
    %280 = vector.extract_strided_slice %277 {offsets = [0, 64], sizes = [8, 32], strides = [1, 1]} : vector<8x128xf32> to vector<8x32xf32>
    %281 = vector.extract_strided_slice %277 {offsets = [0, 96], sizes = [8, 32], strides = [1, 1]} : vector<8x128xf32> to vector<8x32xf32>
    %282 = arith.mulf %279, %232 : vector<8x32xf32>
    %283 = arith.mulf %278, %280 : vector<8x32xf32>
    %284 = arith.addf %282, %283 : vector<8x32xf32>
    %285 = math.tanh %284 : vector<8x32xf32>
    %286 = arith.mulf %281, %285 : vector<8x32xf32>
    %c1_i32_78 = arith.constant 1 : i32
    %287 = arith.subi %c5_i32, %c1_i32_78 : i32
    %c8_i32_79 = arith.constant 8 : i32
    %288 = arith.muli %287, %c8_i32_79 : i32
    %289 = tpu.assume_multiple %288, 8 : i32
    %290 = arith.index_cast %289 : i32 to index
    %c0_80 = arith.constant 0 : index
    %291 = vector.load %arg6[%290, %c0_80] : memref<64x32xf32, #tpu.memory_space<vmem>>, vector<8x32xf32>
    tpu.vector_store %arg6[%290, %c0_80], %286 {strides = array<i32>} : memref<64x32xf32, #tpu.memory_space<vmem>>, vector<8x32xf32>,
    %292 = arith.index_cast %289 : i32 to index
    %c0_81 = arith.constant 0 : index
    %293 = vector.load %arg7[%292, %c0_81] : memref<64x32xf32, #tpu.memory_space<vmem>>, vector<8x32xf32>
    tpu.vector_store %arg7[%292, %c0_81], %284 {strides = array<i32>} : memref<64x32xf32, #tpu.memory_space<vmem>>, vector<8x32xf32>,
    %c6_i32 = arith.constant 6 : i32
    %c0_82 = arith.constant 0 : index
    %c0_83 = arith.constant 0 : index
    %294 = vector.load %arg3[%c0_82, %c0_83] : memref<32x256xf32, #tpu.memory_space<vmem>>, vector<32x256xf32>
    %cst_84 = arith.constant dense<0.000000e+00> : vector<8x256xf32>
    %295 = tpu.matmul %270, %294, %cst_84 {dimension_numbers = #tpu.dot_dimension_numbers<[1], [0], [0], [1], [0, 0, 1, 1], [], []>} : vector<8x32xf32>, vector<32x256xf32>, vector<8x256xf32> -> vector<8x256xf32>
    %c0_85 = arith.constant 0 : index
    %c0_86 = arith.constant 0 : index
    %296 = vector.load %arg4[%c0_85, %c0_86] : memref<32x128xf32, #tpu.memory_space<vmem>>, vector<32x128xf32>
    %cst_87 = arith.constant dense<0.000000e+00> : vector<8x128xf32>
    %297 = tpu.matmul %286, %296, %cst_87 {dimension_numbers = #tpu.dot_dimension_numbers<[1], [0], [0], [1], [0, 0, 1, 1], [], []>} : vector<8x32xf32>, vector<32x128xf32>, vector<8x128xf32> -> vector<8x128xf32>
    %c8_i32_88 = arith.constant 8 : i32
    %298 = arith.muli %c6_i32, %c8_i32_88 : i32
    %299 = tpu.assume_multiple %298, 8 : i32
    %300 = arith.index_cast %299 : i32 to index
    %c0_89 = arith.constant 0 : index
    %301 = vector.load %arg8[%300, %c0_89] : memref<64x128xf32, #tpu.memory_space<vmem>>, vector<8x128xf32>
    %302 = vector.extract_strided_slice %295 {offsets = [0, 0], sizes = [8, 128], strides = [1, 1]} : vector<8x256xf32> to vector<8x128xf32>
    %303 = arith.addf %301, %302 : vector<8x128xf32>
    %304 = vector.extract_strided_slice %295 {offsets = [0, 128], sizes = [8, 128], strides = [1, 1]} : vector<8x256xf32> to vector<8x128xf32>
    %305 = arith.addf %9, %304 : vector<8x128xf32>
    %306 = arith.addf %305, %297 : vector<8x128xf32>
    %307 = math.tanh %303 : vector<8x128xf32>
    %308 = arith.negf %303 : vector<8x128xf32>
    %309 = math.exp %308 : vector<8x128xf32>
    %cst_90 = arith.constant 1.000000e+00 : f32
    %310 = vector.broadcast %cst_90 : f32 to vector<8x128xf32>
    %311 = arith.addf %310, %309 : vector<8x128xf32>
    %312 = arith.divf %310, %311 : vector<8x128xf32>
    %313 = arith.select %15, %307, %312 : vector<8x128xi1>, vector<8x128xf32>
    %314 = vector.extract_strided_slice %313 {offsets = [0, 0], sizes = [8, 32], strides = [1, 1]} : vector<8x128xf32> to vector<8x32xf32>
    %315 = vector.extract_strided_slice %313 {offsets = [0, 32], sizes = [8, 32], strides = [1, 1]} : vector<8x128xf32> to vector<8x32xf32>
    %316 = vector.extract_strided_slice %313 {offsets = [0, 64], sizes = [8, 32], strides = [1, 1]} : vector<8x128xf32> to vector<8x32xf32>
    %317 = vector.extract_strided_slice %313 {offsets = [0, 96], sizes = [8, 32], strides = [1, 1]} : vector<8x128xf32> to vector<8x32xf32>
    %318 = arith.mulf %315, %268 : vector<8x32xf32>
    %319 = arith.mulf %314, %316 : vector<8x32xf32>
    %320 = arith.addf %318, %319 : vector<8x32xf32>
    %321 = math.tanh %320 : vector<8x32xf32>
    %322 = arith.mulf %317, %321 : vector<8x32xf32>
    %323 = math.tanh %306 : vector<8x128xf32>
    %324 = arith.negf %306 : vector<8x128xf32>
    %325 = math.exp %324 : vector<8x128xf32>
    %cst_91 = arith.constant 1.000000e+00 : f32
    %326 = vector.broadcast %cst_91 : f32 to vector<8x128xf32>
    %327 = arith.addf %326, %325 : vector<8x128xf32>
    %328 = arith.divf %326, %327 : vector<8x128xf32>
    %329 = arith.select %15, %323, %328 : vector<8x128xi1>, vector<8x128xf32>
    %330 = vector.extract_strided_slice %329 {offsets = [0, 0], sizes = [8, 32], strides = [1, 1]} : vector<8x128xf32> to vector<8x32xf32>
    %331 = vector.extract_strided_slice %329 {offsets = [0, 32], sizes = [8, 32], strides = [1, 1]} : vector<8x128xf32> to vector<8x32xf32>
    %332 = vector.extract_strided_slice %329 {offsets = [0, 64], sizes = [8, 32], strides = [1, 1]} : vector<8x128xf32> to vector<8x32xf32>
    %333 = vector.extract_strided_slice %329 {offsets = [0, 96], sizes = [8, 32], strides = [1, 1]} : vector<8x128xf32> to vector<8x32xf32>
    %334 = arith.mulf %331, %284 : vector<8x32xf32>
    %335 = arith.mulf %330, %332 : vector<8x32xf32>
    %336 = arith.addf %334, %335 : vector<8x32xf32>
    %337 = math.tanh %336 : vector<8x32xf32>
    %338 = arith.mulf %333, %337 : vector<8x32xf32>
    %c1_i32_92 = arith.constant 1 : i32
    %339 = arith.subi %c6_i32, %c1_i32_92 : i32
    %c8_i32_93 = arith.constant 8 : i32
    %340 = arith.muli %339, %c8_i32_93 : i32
    %341 = tpu.assume_multiple %340, 8 : i32
    %342 = arith.index_cast %341 : i32 to index
    %c0_94 = arith.constant 0 : index
    %343 = vector.load %arg6[%342, %c0_94] : memref<64x32xf32, #tpu.memory_space<vmem>>, vector<8x32xf32>
    tpu.vector_store %arg6[%342, %c0_94], %338 {strides = array<i32>} : memref<64x32xf32, #tpu.memory_space<vmem>>, vector<8x32xf32>,
    %344 = arith.index_cast %341 : i32 to index
    %c0_95 = arith.constant 0 : index
    %345 = vector.load %arg7[%344, %c0_95] : memref<64x32xf32, #tpu.memory_space<vmem>>, vector<8x32xf32>
    tpu.vector_store %arg7[%344, %c0_95], %336 {strides = array<i32>} : memref<64x32xf32, #tpu.memory_space<vmem>>, vector<8x32xf32>,
    %c7_i32 = arith.constant 7 : i32
    %c0_96 = arith.constant 0 : index
    %c0_97 = arith.constant 0 : index
    %346 = vector.load %arg3[%c0_96, %c0_97] : memref<32x256xf32, #tpu.memory_space<vmem>>, vector<32x256xf32>
    %cst_98 = arith.constant dense<0.000000e+00> : vector<8x256xf32>
    %347 = tpu.matmul %322, %346, %cst_98 {dimension_numbers = #tpu.dot_dimension_numbers<[1], [0], [0], [1], [0, 0, 1, 1], [], []>} : vector<8x32xf32>, vector<32x256xf32>, vector<8x256xf32> -> vector<8x256xf32>
    %c0_99 = arith.constant 0 : index
    %c0_100 = arith.constant 0 : index
    %348 = vector.load %arg4[%c0_99, %c0_100] : memref<32x128xf32, #tpu.memory_space<vmem>>, vector<32x128xf32>
    %cst_101 = arith.constant dense<0.000000e+00> : vector<8x128xf32>
    %349 = tpu.matmul %338, %348, %cst_101 {dimension_numbers = #tpu.dot_dimension_numbers<[1], [0], [0], [1], [0, 0, 1, 1], [], []>} : vector<8x32xf32>, vector<32x128xf32>, vector<8x128xf32> -> vector<8x128xf32>
    %c8_i32_102 = arith.constant 8 : i32
    %350 = arith.muli %c7_i32, %c8_i32_102 : i32
    %351 = tpu.assume_multiple %350, 8 : i32
    %352 = arith.index_cast %351 : i32 to index
    %c0_103 = arith.constant 0 : index
    %353 = vector.load %arg8[%352, %c0_103] : memref<64x128xf32, #tpu.memory_space<vmem>>, vector<8x128xf32>
    %354 = vector.extract_strided_slice %347 {offsets = [0, 0], sizes = [8, 128], strides = [1, 1]} : vector<8x256xf32> to vector<8x128xf32>
    %355 = arith.addf %353, %354 : vector<8x128xf32>
    %356 = vector.extract_strided_slice %347 {offsets = [0, 128], sizes = [8, 128], strides = [1, 1]} : vector<8x256xf32> to vector<8x128xf32>
    %357 = arith.addf %9, %356 : vector<8x128xf32>
    %358 = arith.addf %357, %349 : vector<8x128xf32>
    %359 = math.tanh %355 : vector<8x128xf32>
    %360 = arith.negf %355 : vector<8x128xf32>
    %361 = math.exp %360 : vector<8x128xf32>
    %cst_104 = arith.constant 1.000000e+00 : f32
    %362 = vector.broadcast %cst_104 : f32 to vector<8x128xf32>
    %363 = arith.addf %362, %361 : vector<8x128xf32>
    %364 = arith.divf %362, %363 : vector<8x128xf32>
    %365 = arith.select %15, %359, %364 : vector<8x128xi1>, vector<8x128xf32>
    %366 = vector.extract_strided_slice %365 {offsets = [0, 0], sizes = [8, 32], strides = [1, 1]} : vector<8x128xf32> to vector<8x32xf32>
    %367 = vector.extract_strided_slice %365 {offsets = [0, 32], sizes = [8, 32], strides = [1, 1]} : vector<8x128xf32> to vector<8x32xf32>
    %368 = vector.extract_strided_slice %365 {offsets = [0, 64], sizes = [8, 32], strides = [1, 1]} : vector<8x128xf32> to vector<8x32xf32>
    %369 = vector.extract_strided_slice %365 {offsets = [0, 96], sizes = [8, 32], strides = [1, 1]} : vector<8x128xf32> to vector<8x32xf32>
    %370 = arith.mulf %367, %320 : vector<8x32xf32>
    %371 = arith.mulf %366, %368 : vector<8x32xf32>
    %372 = arith.addf %370, %371 : vector<8x32xf32>
    %373 = math.tanh %372 : vector<8x32xf32>
    %374 = arith.mulf %369, %373 : vector<8x32xf32>
    %375 = math.tanh %358 : vector<8x128xf32>
    %376 = arith.negf %358 : vector<8x128xf32>
    %377 = math.exp %376 : vector<8x128xf32>
    %cst_105 = arith.constant 1.000000e+00 : f32
    %378 = vector.broadcast %cst_105 : f32 to vector<8x128xf32>
    %379 = arith.addf %378, %377 : vector<8x128xf32>
    %380 = arith.divf %378, %379 : vector<8x128xf32>
    %381 = arith.select %15, %375, %380 : vector<8x128xi1>, vector<8x128xf32>
    %382 = vector.extract_strided_slice %381 {offsets = [0, 0], sizes = [8, 32], strides = [1, 1]} : vector<8x128xf32> to vector<8x32xf32>
    %383 = vector.extract_strided_slice %381 {offsets = [0, 32], sizes = [8, 32], strides = [1, 1]} : vector<8x128xf32> to vector<8x32xf32>
    %384 = vector.extract_strided_slice %381 {offsets = [0, 64], sizes = [8, 32], strides = [1, 1]} : vector<8x128xf32> to vector<8x32xf32>
    %385 = vector.extract_strided_slice %381 {offsets = [0, 96], sizes = [8, 32], strides = [1, 1]} : vector<8x128xf32> to vector<8x32xf32>
    %386 = arith.mulf %383, %336 : vector<8x32xf32>
    %387 = arith.mulf %382, %384 : vector<8x32xf32>
    %388 = arith.addf %386, %387 : vector<8x32xf32>
    %389 = math.tanh %388 : vector<8x32xf32>
    %390 = arith.mulf %385, %389 : vector<8x32xf32>
    %c1_i32_106 = arith.constant 1 : i32
    %391 = arith.subi %c7_i32, %c1_i32_106 : i32
    %c8_i32_107 = arith.constant 8 : i32
    %392 = arith.muli %391, %c8_i32_107 : i32
    %393 = tpu.assume_multiple %392, 8 : i32
    %394 = arith.index_cast %393 : i32 to index
    %c0_108 = arith.constant 0 : index
    %395 = vector.load %arg6[%394, %c0_108] : memref<64x32xf32, #tpu.memory_space<vmem>>, vector<8x32xf32>
    tpu.vector_store %arg6[%394, %c0_108], %390 {strides = array<i32>} : memref<64x32xf32, #tpu.memory_space<vmem>>, vector<8x32xf32>,
    %396 = arith.index_cast %393 : i32 to index
    %c0_109 = arith.constant 0 : index
    %397 = vector.load %arg7[%396, %c0_109] : memref<64x32xf32, #tpu.memory_space<vmem>>, vector<8x32xf32>
    tpu.vector_store %arg7[%396, %c0_109], %388 {strides = array<i32>} : memref<64x32xf32, #tpu.memory_space<vmem>>, vector<8x32xf32>,
    %c7_i32_110 = arith.constant 7 : i32
    %c0_111 = arith.constant 0 : index
    %c0_112 = arith.constant 0 : index
    %398 = vector.load %arg3[%c0_111, %c0_112] : memref<32x256xf32, #tpu.memory_space<vmem>>, vector<32x256xf32>
    %cst_113 = arith.constant dense<0.000000e+00> : vector<8x256xf32>
    %399 = tpu.matmul %374, %398, %cst_113 {dimension_numbers = #tpu.dot_dimension_numbers<[1], [0], [0], [1], [0, 0, 1, 1], [], []>} : vector<8x32xf32>, vector<32x256xf32>, vector<8x256xf32> -> vector<8x256xf32>
    %c0_114 = arith.constant 0 : index
    %c0_115 = arith.constant 0 : index
    %400 = vector.load %arg4[%c0_114, %c0_115] : memref<32x128xf32, #tpu.memory_space<vmem>>, vector<32x128xf32>
    %cst_116 = arith.constant dense<0.000000e+00> : vector<8x128xf32>
    %401 = tpu.matmul %390, %400, %cst_116 {dimension_numbers = #tpu.dot_dimension_numbers<[1], [0], [0], [1], [0, 0, 1, 1], [], []>} : vector<8x32xf32>, vector<32x128xf32>, vector<8x128xf32> -> vector<8x128xf32>
    %402 = vector.extract_strided_slice %399 {offsets = [0, 128], sizes = [8, 128], strides = [1, 1]} : vector<8x256xf32> to vector<8x128xf32>
    %403 = arith.addf %9, %402 : vector<8x128xf32>
    %404 = arith.addf %403, %401 : vector<8x128xf32>
    %405 = math.tanh %404 : vector<8x128xf32>
    %406 = arith.negf %404 : vector<8x128xf32>
    %407 = math.exp %406 : vector<8x128xf32>
    %cst_117 = arith.constant 1.000000e+00 : f32
    %408 = vector.broadcast %cst_117 : f32 to vector<8x128xf32>
    %409 = arith.addf %408, %407 : vector<8x128xf32>
    %410 = arith.divf %408, %409 : vector<8x128xf32>
    %411 = arith.select %15, %405, %410 : vector<8x128xi1>, vector<8x128xf32>
    %412 = vector.extract_strided_slice %411 {offsets = [0, 0], sizes = [8, 32], strides = [1, 1]} : vector<8x128xf32> to vector<8x32xf32>
    %413 = vector.extract_strided_slice %411 {offsets = [0, 32], sizes = [8, 32], strides = [1, 1]} : vector<8x128xf32> to vector<8x32xf32>
    %414 = vector.extract_strided_slice %411 {offsets = [0, 64], sizes = [8, 32], strides = [1, 1]} : vector<8x128xf32> to vector<8x32xf32>
    %415 = vector.extract_strided_slice %411 {offsets = [0, 96], sizes = [8, 32], strides = [1, 1]} : vector<8x128xf32> to vector<8x32xf32>
    %416 = arith.mulf %413, %388 : vector<8x32xf32>
    %417 = arith.mulf %412, %414 : vector<8x32xf32>
    %418 = arith.addf %416, %417 : vector<8x32xf32>
    %419 = math.tanh %418 : vector<8x32xf32>
    %420 = arith.mulf %415, %419 : vector<8x32xf32>
    %c56_i32 = arith.constant 56 : i32
    %421 = tpu.assume_multiple %c56_i32, 8 : i32
    %422 = arith.index_cast %421 : i32 to index
    %c0_118 = arith.constant 0 : index
    %423 = vector.load %arg6[%422, %c0_118] : memref<64x32xf32, #tpu.memory_space<vmem>>, vector<8x32xf32>
    tpu.vector_store %arg6[%422, %c0_118], %420 {strides = array<i32>} : memref<64x32xf32, #tpu.memory_space<vmem>>, vector<8x32xf32>,
    %424 = arith.index_cast %421 : i32 to index
    %c0_119 = arith.constant 0 : index
    %425 = vector.load %arg7[%424, %c0_119] : memref<64x32xf32, #tpu.memory_space<vmem>>, vector<8x32xf32>
    tpu.vector_store %arg7[%424, %c0_119], %418 {strides = array<i32>} : memref<64x32xf32, #tpu.memory_space<vmem>>, vector<8x32xf32>,
    return
  }
}

</mosaic_0001>

<llo_original>
// kernel: tpu_custom_call.1
$region0: #{tpu_custom_call.1}
  #allocation0 [shape = 'u32[]', space=smem, size = 0x4, offset = 0x4, fixed_abs, tag = 'smem constant byte address 0x4 - core index']
  #allocation1 [shape = 'u32[144,128]{1,0:T(1,128)}', space=vmem, size = 0x12000, scoped, tag = 'internal scratch']
  #allocation2 [shape = 'f32[64,128]{1,0:T(8,128)}', space=vmem, size = 0x8000, scoped, tag = 'scratch operand']
  %s0 = inlined_call_operand.vmem [shape: f32[64,16], index: 0, kind: input, shape index: {}]
  %s1 = inlined_call_operand.vmem [shape: f32[16,128], index: 1, kind: input, shape index: {}]
  %s2 = inlined_call_operand.vmem [shape: f32[1,128], index: 2, kind: input, shape index: {}]
  %s3 = inlined_call_operand.vmem [shape: f32[32,256], index: 3, kind: input, shape index: {}]
  %s4 = inlined_call_operand.hbm [shape: f32[32,128], index: 4, kind: input, shape index: {}]
  %s5 = inlined_call_operand.vmem [shape: f32[1,128], index: 5, kind: input, shape index: {}]
  %s6 = inlined_call_operand.vmem [shape: f32[64,32], index: 6, kind: output, shape index: {0}]
  %s7 = inlined_call_operand.vmem [shape: f32[64,32], index: 7, kind: output, shape index: {1}]
  %8 = xla_tuple %s6, %s7
  %s9 = sld [smem:[#allocation0]]
  $region46: #{tpu_custom_call.1} parent=0
    _
  %s11 = ssub.s32 1, %s9
  %s12 = scalar_select 0, %s11, %s9
  $region1: #{tpu_custom_call.1} parent=0
    #allocation3 [shape = 'u8[16384]{0}', space=vmem, size = 0x4000, scoped, tag = 'input window, operand 4, single buffered']
    #allocation4 [shape = 's32[1]{0}', space=sflag, size = 0x4, scoped, tag = 'scoped memory for tpu_custom_call.1']
    %13 = vsyncpa [#allocation4], 0
    // Predicated region
    $region2: #{tpu_custom_call.1} parent=1 // pred_check
      _
    $region3: #{tpu_custom_call.1} parent=1 // pred_check_branch
      %15 = sbr.rel (0) target = $region5
    $region4: #{tpu_custom_call.1} parent=1 // pred_region
      _
    $region5: #{tpu_custom_call.1} parent=1 // pred_fallthru
      _
    // Predicated region
    $region6: #{tpu_custom_call.1} parent=1 // pred_check
      _
    $region7: #{tpu_custom_call.1} parent=1 // pred_check_branch
      %17 = sbr.rel (0) target = $region9
    $region8: #{tpu_custom_call.1} parent=1 // pred_region
      _
    $region9: #{tpu_custom_call.1} parent=1 // pred_fallthru
      _
    // Predicated region
    $region10: #{tpu_custom_call.1} parent=1 // pred_check
      _
    $region11: #{tpu_custom_call.1} parent=1 // pred_check_branch
      %19 = sbr.rel (0) target = $region13
    $region12: #{tpu_custom_call.1} parent=1 // pred_region
      _
    $region13: #{tpu_custom_call.1} parent=1 // pred_fallthru
      _
    // Predicated region
    $region14: #{tpu_custom_call.1} parent=1 // pred_check
      _
    $region15: #{tpu_custom_call.1} parent=1 // pred_check_branch
      %21 = sbr.rel (0) target = $region17
    $region16: #{tpu_custom_call.1} parent=1 // pred_region
      _
    $region17: #{tpu_custom_call.1} parent=1 // pred_fallthru
      _
    // Predicated region
    $region18: #{tpu_custom_call.1} parent=1 // pred_check
      _
    $region19: #{tpu_custom_call.1} parent=1 // pred_check_branch
      %23 = sbr.rel (0) target = $region21
    $region20: #{tpu_custom_call.1} parent=1 // pred_region
      %s25 = ssub.s32 512, 512
      %26 = vsyncadd [#allocation4], %s25
      %s27 = sshll.u32 [#allocation3], 4
      %s28 = int_to_ptr.vmem [resolvable:$true] %s27
      %33 = dma.hbm_to_vmem [thread:$0]  %s4, 512, %s28, [#allocation4], 128, 128, 8
    $region21: #{tpu_custom_call.1} parent=1 // pred_fallthru
      _
    // Predicated region
    $region22: #{tpu_custom_call.1} parent=1 // pred_check
      _
    $region23: #{tpu_custom_call.1} parent=1 // pred_check_branch
      %35 = sbr.rel (0) target = $region25
    $region24: #{tpu_custom_call.1} parent=1 // pred_region
      _
    $region25: #{tpu_custom_call.1} parent=1 // pred_fallthru
      _
    // Predicated region
    $region26: #{tpu_custom_call.1} parent=1 // pred_check
      _
    $region27: #{tpu_custom_call.1} parent=1 // pred_check_branch
      %37 = sbr.rel (0) target = $region29
    $region28: #{tpu_custom_call.1} parent=1 // pred_region
      %38 = dma.done [#allocation4], 512
    $region29: #{tpu_custom_call.1} parent=1 // pred_fallthru
      _
    %v39 = vld [vmem:[%s0] sm:$0xff]
    %v40 = vld [vmem:[%s0 + $0x8] sm:$0xff]
    %v41 = vld [vmem:[%s0 + $0x10] sm:$0xff]
    %v42 = vld [vmem:[%s0 + $0x18] sm:$0xff]
    %v43 = vld [vmem:[%s0 + $0x20] sm:$0xff]
    %v44 = vld [vmem:[%s0 + $0x28] sm:$0xff]
    %v45 = vld [vmem:[%s0 + $0x30] sm:$0xff]
    %v46 = vld [vmem:[%s0 + $0x38] sm:$0xff]
    %v47 = vld [vmem:[%s1] sm:$0xff]
    %v48 = vld [vmem:[%s1 + $0x8] sm:$0xff]
    %v49 = vld [vmem:[%s2] sm:$0x1]
    %v51 = vlaneseq
    %v52 = vshrl.u32 %v51, 7
    %v53 = vsub.s32 0, %v52
    %v54 = vrot.slane %v49, %v53
    %vm56 = vcmask 130048
    %v58 = vsel %vm56, %v39, 0
    %v61 = vsel %vm56, %v40, 0
    %v64 = vsel %vm56, %v41, 0
    %v67 = vsel %vm56, %v42, 0
    %v70 = vsel %vm56, %v43, 0
    %v73 = vsel %vm56, %v44, 0
    %v76 = vsel %vm56, %v45, 0
    %v79 = vsel %vm56, %v46, 0
    %81 = vmatprep.subr.mxu0 0.0
    %82 = vmatpush1.msra.mxu0 %v47
    %83 = vmatprep.subr.mxu0 0.0
    %84 = vmatpush1.msra.mxu0 %v48
    %85 = vmatprep.subr.mxu0 0.0
    %86 = vmatpush1.msra.mxu0 0.0
    %87 = vmatprep.subr.mxu0 0.0
    %88 = vmatpush1.msra.mxu0 0.0
    %89 = vmatprep.subr.mxu0 0.0
    %90 = vmatpush1.msra.mxu0 0.0
    %91 = vmatprep.subr.mxu0 0.0
    %92 = vmatpush1.msra.mxu0 0.0
    %93 = vmatprep.subr.mxu0 0.0
    %94 = vmatpush1.msra.mxu0 0.0
    %95 = vmatprep.subr.mxu0 0.0
    %96 = vmatpush1.msra.mxu0 0.0
    %97 = vmatprep.subr.mxu0 0.0
    %98 = vmatpush1.msra.mxu0 0.0
    %99 = vmatprep.subr.mxu0 0.0
    %100 = vmatpush1.msra.mxu0 0.0
    %101 = vmatprep.subr.mxu0 0.0
    %102 = vmatpush1.msra.mxu0 0.0
    %103 = vmatprep.subr.mxu0 0.0
    %104 = vmatpush1.msra.mxu0 0.0
    %105 = vmatprep.subr.mxu0 0.0
    %106 = vmatpush1.msra.mxu0 0.0
    %107 = vmatprep.subr.mxu0 0.0
    %108 = vmatpush1.msra.mxu0 0.0
    %109 = vmatprep.subr.mxu0 0.0
    %110 = vmatpush1.msra.mxu0 0.0
    %111 = vmatprep.subr.mxu0 0.0
    %112 = vmatpush1.msra.mxu0 0.0
    %113 = vmatprep.subr.mxu0 0.0
    %114 = vmatpush1.msra.mxu0 0.0
    %115 = vmatprep.subr.mxu0 0.0
    %116 = vmatpush1.msra.mxu0 0.0
    %117 = vmatprep.subr.mxu0 0.0
    %118 = vmatpush1.msra.mxu0 0.0
    %119 = vmatprep.subr.mxu0 0.0
    %120 = vmatpush1.msra.mxu0 0.0
    %121 = vmatprep.subr.mxu0 0.0
    %122 = vmatpush1.msra.mxu0 0.0
    %123 = vmatprep.subr.mxu0 0.0
    %124 = vmatpush1.msra.mxu0 0.0
    %125 = vmatprep.subr.mxu0 0.0
    %126 = vmatpush1.msra.mxu0 0.0
    %127 = vmatprep.subr.mxu0 0.0
    %128 = vmatpush1.msra.mxu0 0.0
    %129 = vmatprep.subr.mxu0 0.0
    %130 = vmatpush1.msra.mxu0 0.0
    %131 = vmatprep.subr.mxu0 0.0
    %132 = vmatpush1.msra.mxu0 0.0
    %133 = vmatprep.subr.mxu0 0.0
    %134 = vmatpush1.msra.mxu0 0.0
    %135 = vmatprep.subr.mxu0 0.0
    %136 = vmatpush1.msra.mxu0 0.0
    %137 = vmatprep.subr.mxu0 0.0
    %138 = vmatpush1.msra.mxu0 0.0
    %139 = vmatprep.subr.mxu0 0.0
    %140 = vmatpush1.msra.mxu0 0.0
    %141 = vmatprep.subr.mxu0 0.0
    %142 = vmatpush1.msra.mxu0 0.0
    %143 = vmatprep.subr.mxu0 0.0
    %144 = vmatpush1.msra.mxu0 0.0
    %145 = vmatprep.mubr.f32.mxu0 0.0
    %146 = vmatmul.mubr.f32.gmra.mrb[0].mxu0 %v58
    %v147 = vpop.f32.mrb[0].mxu0
    %v148 = vadd.f32 %v54, %v147
    %v149 = vpop.f32.mrb[0].mxu0
    %150 = vmatprep.mubr.f32.mxu0 0.0
    %151 = vmatmul.mubr.f32.gmra.mrb[0].mxu0 %v61
    %v152 = vpop.f32.mrb[0].mxu0
    %v153 = vadd.f32 %v54, %v152
    %v154 = vpop.f32.mrb[0].mxu0
    %155 = vmatprep.mubr.f32.mxu0 0.0
    %156 = vmatmul.mubr.f32.gmra.mrb[0].mxu0 %v64
    %v157 = vpop.f32.mrb[0].mxu0
    %v158 = vadd.f32 %v54, %v157
    %v159 = vpop.f32.mrb[0].mxu0
    %160 = vmatprep.mubr.f32.mxu0 0.0
    %161 = vmatmul.mubr.f32.gmra.mrb[0].mxu0 %v67
    %v162 = vpop.f32.mrb[0].mxu0
    %v163 = vadd.f32 %v54, %v162
    %v164 = vpop.f32.mrb[0].mxu0
    %165 = vmatprep.mubr.f32.mxu0 0.0
    %166 = vmatmul.mubr.f32.gmra.mrb[0].mxu0 %v70
    %v167 = vpop.f32.mrb[0].mxu0
    %v168 = vadd.f32 %v54, %v167
    %v169 = vpop.f32.mrb[0].mxu0
    %170 = vmatprep.mubr.f32.mxu0 0.0
    %171 = vmatmul.mubr.f32.gmra.mrb[0].mxu0 %v73
    %v172 = vpop.f32.mrb[0].mxu0
    %v173 = vadd.f32 %v54, %v172
    %v174 = vpop.f32.mrb[0].mxu0
    %175 = vmatprep.mubr.f32.mxu0 0.0
    %176 = vmatmul.mubr.f32.gmra.mrb[0].mxu0 %v76
    %v177 = vpop.f32.mrb[0].mxu0
    %v178 = vadd.f32 %v54, %v177
    %v179 = vpop.f32.mrb[0].mxu0
    %180 = vmatprep.mubr.f32.mxu0 0.0
    %181 = vmatmul.mubr.f32.gmra.mrb[0].mxu0 %v79
    %v182 = vpop.f32.mrb[0].mxu0
    %v183 = vadd.f32 %v54, %v182
    %v184 = vpop.f32.mrb[0].mxu0
    %185 = vdwg.mxu0
    %186 = vst [vmem:[#allocation2] sm:$0xff] %v148
    %187 = vst [vmem:[#allocation2 + $0x8] sm:$0xff] %v153
    %188 = vst [vmem:[#allocation2 + $0x10] sm:$0xff] %v158
    %189 = vst [vmem:[#allocation2 + $0x18] sm:$0xff] %v163
    %190 = vst [vmem:[#allocation2 + $0x20] sm:$0xff] %v168
    %191 = vst [vmem:[#allocation2 + $0x28] sm:$0xff] %v173
    %192 = vst [vmem:[#allocation2 + $0x30] sm:$0xff] %v178
    %193 = vst [vmem:[#allocation2 + $0x38] sm:$0xff] %v183
    %v194 = vld [vmem:[%s5] sm:$0x1]
    %v196 = vlaneseq
    %v197 = vshrl.u32 %v196, 7
    %v198 = vsub.s32 0, %v197
    %v199 = vrot.slane %v194, %v198
    %v201 = vlaneseq
    %v202 = vand.u32 %v201, 127
    %vm203 = vcmp.ge.s32.totalorder %v202, 64
    %vm204 = vcmp.lt.s32.totalorder %v202, 96
    %vm205 = vmand %vm203, %vm204
    %v206 = vld [vmem:[#allocation2] sm:$0xff]
    %v207 = vtanh.pop %v206
    %v208 = vxor.u32 %v206, 2147483648
    %v209 = vmul.f32 %v208, 1.442695
    %v210 = vpow.pop %v209
    %v211 = vadd.f32 %v210, 1.0
    %v212 = vrcp.pop %v211
    %v213 = vmul.f32 1.0, %v212
    %v214 = vsel %vm205, %v207, %v213
    %v215 = vmul.f32 %v214, 0.0
    %217 = vrot.lane.b32.xlu0 %v214, 64
    %v218 = vpop.permute.xlu0 %217
    %v220 = vmul.f32 %v214, %v218
    %222 = vrot.lane.b32.xlu0 %v220, 32
    %v223 = vpop.permute.xlu0 %222
    %v225 = vadd.f32 %v215, %v223
    %v226 = vtanh.pop %v225
    %228 = vrot.lane.b32.xlu0 %v226, 64
    %v229 = vpop.permute.xlu0 %228
    %v231 = vmul.f32 %v214, %v229
    %v232 = vld [vmem:[%s3] sm:$0xff]
    %v233 = vld [vmem:[%s3 + $0x8] sm:$0xff]
    %v234 = vld [vmem:[%s3 + $0x10] sm:$0xff]
    %v235 = vld [vmem:[%s3 + $0x18] sm:$0xff]
    %v236 = vld [vmem:[%s3 + $0x20] sm:$0xff]
    %v237 = vld [vmem:[%s3 + $0x28] sm:$0xff]
    %v238 = vld [vmem:[%s3 + $0x30] sm:$0xff]
    %v239 = vld [vmem:[%s3 + $0x38] sm:$0xff]
    %241 = vrot.lane.b32.xlu0 %v231, 32
    %v242 = vpop.permute.xlu0 %241
    %vm243 = vcmask 261120
    %v244 = vsel %vm243, %v242, 0
    %246 = vmatprep.subr.mxu0 %v233
    %247 = vmatpush1.msra.mxu0 %v232
    %248 = vmatprep.subr.mxu0 %v235
    %249 = vmatpush1.msra.mxu0 %v234
    %250 = vmatprep.subr.mxu0 %v237
    %251 = vmatpush1.msra.mxu0 %v236
    %252 = vmatprep.subr.mxu0 %v239
    %253 = vmatpush1.msra.mxu0 %v238
    %254 = vmatprep.subr.mxu0 0.0
    %255 = vmatpush1.msra.mxu0 0.0
    %256 = vmatprep.subr.mxu0 0.0
    %257 = vmatpush1.msra.mxu0 0.0
    %258 = vmatprep.subr.mxu0 0.0
    %259 = vmatpush1.msra.mxu0 0.0
    %260 = vmatprep.subr.mxu0 0.0
    %261 = vmatpush1.msra.mxu0 0.0
    %262 = vmatprep.subr.mxu0 0.0
    %263 = vmatpush1.msra.mxu0 0.0
    %264 = vmatprep.subr.mxu0 0.0
    %265 = vmatpush1.msra.mxu0 0.0
    %266 = vmatprep.subr.mxu0 0.0
    %267 = vmatpush1.msra.mxu0 0.0
    %268 = vmatprep.subr.mxu0 0.0
    %269 = vmatpush1.msra.mxu0 0.0
    %270 = vmatprep.subr.mxu0 0.0
    %271 = vmatpush1.msra.mxu0 0.0
    %272 = vmatprep.subr.mxu0 0.0
    %273 = vmatpush1.msra.mxu0 0.0
    %274 = vmatprep.subr.mxu0 0.0
    %275 = vmatpush1.msra.mxu0 0.0
    %276 = vmatprep.subr.mxu0 0.0
    %277 = vmatpush1.msra.mxu0 0.0
    %278 = vmatprep.subr.mxu0 0.0
    %279 = vmatpush1.msra.mxu0 0.0
    %280 = vmatprep.subr.mxu0 0.0
    %281 = vmatpush1.msra.mxu0 0.0
    %282 = vmatprep.subr.mxu0 0.0
    %283 = vmatpush1.msra.mxu0 0.0
    %284 = vmatprep.subr.mxu0 0.0
    %285 = vmatpush1.msra.mxu0 0.0
    %286 = vmatprep.subr.mxu0 0.0
    %287 = vmatpush1.msra.mxu0 0.0
    %288 = vmatprep.subr.mxu0 0.0
    %289 = vmatpush1.msra.mxu0 0.0
    %290 = vmatprep.subr.mxu0 0.0
    %291 = vmatpush1.msra.mxu0 0.0
    %292 = vmatprep.subr.mxu0 0.0
    %293 = vmatpush1.msra.mxu0 0.0
    %294 = vmatprep.subr.mxu0 0.0
    %295 = vmatpush1.msra.mxu0 0.0
    %296 = vmatprep.subr.mxu0 0.0
    %297 = vmatpush1.msra.mxu0 0.0
    %298 = vmatprep.subr.mxu0 0.0
    %299 = vmatpush1.msra.mxu0 0.0
    %300 = vmatprep.subr.mxu0 0.0
    %301 = vmatpush1.msra.mxu0 0.0
    %302 = vmatprep.subr.mxu0 0.0
    %303 = vmatpush1.msra.mxu0 0.0
    %304 = vmatprep.subr.mxu0 0.0
    %305 = vmatpush1.msra.mxu0 0.0
    %306 = vmatprep.subr.mxu0 0.0
    %307 = vmatpush1.msra.mxu0 0.0
    %308 = vmatprep.subr.mxu0 0.0
    %309 = vmatpush1.msra.mxu0 0.0
    %310 = vmatprep.mubr.f32.mxu0 0.0
    %311 = vmatmul.mubr.f32.gmra.mrb[0].mxu0 %v244
    %v312 = vpop.f32.mrb[0].mxu0
    %v313 = vadd.f32 0.0, %v312
    %v314 = vpop.f32.mrb[0].mxu0
    %v315 = vadd.f32 0.0, %v314
    %316 = vdwg.mxu0
    %v317 = vld [vmem:[#allocation3] sm:$0xff]
    %v318 = vld [vmem:[#allocation3 + $0x8] sm:$0xff]
    %v319 = vld [vmem:[#allocation3 + $0x10] sm:$0xff]
    %v320 = vld [vmem:[#allocation3 + $0x18] sm:$0xff]
    %v322 = vsel %vm243, 0.0, 0
    %324 = vmatprep.subr.mxu0 0.0
    %325 = vmatpush1.msra.mxu0 %v317
    %326 = vmatprep.subr.mxu0 0.0
    %327 = vmatpush1.msra.mxu0 %v318
    %328 = vmatprep.subr.mxu0 0.0
    %329 = vmatpush1.msra.mxu0 %v319
    %330 = vmatprep.subr.mxu0 0.0
    %331 = vmatpush1.msra.mxu0 %v320
    %332 = vmatprep.subr.mxu0 0.0
    %333 = vmatpush1.msra.mxu0 0.0
    %334 = vmatprep.subr.mxu0 0.0
    %335 = vmatpush1.msra.mxu0 0.0
    %336 = vmatprep.subr.mxu0 0.0
    %337 = vmatpush1.msra.mxu0 0.0
    %338 = vmatprep.subr.mxu0 0.0
    %339 = vmatpush1.msra.mxu0 0.0
    %340 = vmatprep.subr.mxu0 0.0
    %341 = vmatpush1.msra.mxu0 0.0
    %342 = vmatprep.subr.mxu0 0.0
    %343 = vmatpush1.msra.mxu0 0.0
    %344 = vmatprep.subr.mxu0 0.0
    %345 = vmatpush1.msra.mxu0 0.0
    %346 = vmatprep.subr.mxu0 0.0
    %347 = vmatpush1.msra.mxu0 0.0
    %348 = vmatprep.subr.mxu0 0.0
    %349 = vmatpush1.msra.mxu0 0.0
    %350 = vmatprep.subr.mxu0 0.0
    %351 = vmatpush1.msra.mxu0 0.0
    %352 = vmatprep.subr.mxu0 0.0
    %353 = vmatpush1.msra.mxu0 0.0
    %354 = vmatprep.subr.mxu0 0.0
    %355 = vmatpush1.msra.mxu0 0.0
    %356 = vmatprep.subr.mxu0 0.0
    %357 = vmatpush1.msra.mxu0 0.0
    %358 = vmatprep.subr.mxu0 0.0
    %359 = vmatpush1.msra.mxu0 0.0
    %360 = vmatprep.subr.mxu0 0.0
    %361 = vmatpush1.msra.mxu0 0.0
    %362 = vmatprep.subr.mxu0 0.0
    %363 = vmatpush1.msra.mxu0 0.0
    %364 = vmatprep.subr.mxu0 0.0
    %365 = vmatpush1.msra.mxu0 0.0
    %366 = vmatprep.subr.mxu0 0.0
    %367 = vmatpush1.msra.mxu0 0.0
    %368 = vmatprep.subr.mxu0 0.0
    %369 = vmatpush1.msra.mxu0 0.0
    %370 = vmatprep.subr.mxu0 0.0
    %371 = vmatpush1.msra.mxu0 0.0
    %372 = vmatprep.subr.mxu0 0.0
    %373 = vmatpush1.msra.mxu0 0.0
    %374 = vmatprep.subr.mxu0 0.0
    %375 = vmatpush1.msra.mxu0 0.0
    %376 = vmatprep.subr.mxu0 0.0
    %377 = vmatpush1.msra.mxu0 0.0
    %378 = vmatprep.subr.mxu0 0.0
    %379 = vmatpush1.msra.mxu0 0.0
    %380 = vmatprep.subr.mxu0 0.0
    %381 = vmatpush1.msra.mxu0 0.0
    %382 = vmatprep.subr.mxu0 0.0
    %383 = vmatpush1.msra.mxu0 0.0
    %384 = vmatprep.subr.mxu0 0.0
    %385 = vmatpush1.msra.mxu0 0.0
    %386 = vmatprep.subr.mxu0 0.0
    %387 = vmatpush1.msra.mxu0 0.0
    %388 = vmatprep.mubr.f32.mxu0 0.0
    %389 = vmatmul.mubr.f32.gmra.mrb[0].mxu0 %v322
    %v390 = vpop.f32.mrb[0].mxu0
    %v391 = vadd.f32 0.0, %v390
    %v392 = vpop.f32.mrb[0].mxu0
    %393 = vdwg.mxu0
    %s394 = scalar_lea.vmem [#allocation2], 8
    %v395 = vld [vmem:[%s394] sm:$0xff]
    %v396 = vadd.f32 %v395, %v313
    %v397 = vadd.f32 %v199, %v315
    %v398 = vadd.f32 %v397, %v391
    %v399 = vtanh.pop %v396
    %v400 = vxor.u32 %v396, 2147483648
    %v401 = vmul.f32 %v400, 1.442695
    %v402 = vpow.pop %v401
    %v403 = vadd.f32 %v402, 1.0
    %v404 = vrcp.pop %v403
    %v405 = vmul.f32 1.0, %v404
    %v406 = vsel %vm205, %v399, %v405
    %v407 = vmul.f32 %v406, %v225
    %409 = vrot.lane.b32.xlu0 %v406, 64
    %v410 = vpop.permute.xlu0 %409
    %v412 = vmul.f32 %v406, %v410
    %414 = vrot.lane.b32.xlu0 %v412, 32
    %v415 = vpop.permute.xlu0 %414
    %v417 = vadd.f32 %v407, %v415
    %v418 = vtanh.pop %v417
    %420 = vrot.lane.b32.xlu0 %v418, 64
    %v421 = vpop.permute.xlu0 %420
    %v423 = vmul.f32 %v406, %v421
    %v424 = vtanh.pop %v398
    %v425 = vxor.u32 %v398, 2147483648
    %v426 = vmul.f32 %v425, 1.442695
    %v427 = vpow.pop %v426
    %v428 = vadd.f32 %v427, 1.0
    %v429 = vrcp.pop %v428
    %v430 = vmul.f32 1.0, %v429
    %v431 = vsel %vm205, %v424, %v430
    %v432 = vmul.f32 %v431, 0.0
    %434 = vrot.lane.b32.xlu0 %v431, 64
    %v435 = vpop.permute.xlu0 %434
    %v437 = vmul.f32 %v431, %v435
    %439 = vrot.lane.b32.xlu0 %v437, 32
    %v440 = vpop.permute.xlu0 %439
    %v442 = vadd.f32 %v432, %v440
    %v443 = vtanh.pop %v442
    %445 = vrot.lane.b32.xlu0 %v443, 64
    %v446 = vpop.permute.xlu0 %445
    %v448 = vmul.f32 %v431, %v446
    %450 = vrot.lane.b32.xlu0 %v448, 32
    %v451 = vpop.permute.xlu0 %450
    %453 = vst.msk [vmem:[%s6] sm:$0xff] %vm243, %v451
    %455 = vrot.lane.b32.xlu0 %v442, 96
    %v456 = vpop.permute.xlu0 %455
    %458 = vst.msk [vmem:[%s7] sm:$0xff] %vm243, %v456
    %v459 = vld [vmem:[%s3] sm:$0xff]
    %v460 = vld [vmem:[%s3 + $0x8] sm:$0xff]
    %v461 = vld [vmem:[%s3 + $0x10] sm:$0xff]
    %v462 = vld [vmem:[%s3 + $0x18] sm:$0xff]
    %v463 = vld [vmem:[%s3 + $0x20] sm:$0xff]
    %v464 = vld [vmem:[%s3 + $0x28] sm:$0xff]
    %v465 = vld [vmem:[%s3 + $0x30] sm:$0xff]
    %v466 = vld [vmem:[%s3 + $0x38] sm:$0xff]
    %468 = vrot.lane.b32.xlu0 %v423, 32
    %v469 = vpop.permute.xlu0 %468
    %v470 = vsel %vm243, %v469, 0
    %472 = vmatprep.subr.mxu0 %v460
    %473 = vmatpush1.msra.mxu0 %v459
    %474 = vmatprep.subr.mxu0 %v462
    %475 = vmatpush1.msra.mxu0 %v461
    %476 = vmatprep.subr.mxu0 %v464
    %477 = vmatpush1.msra.mxu0 %v463
    %478 = vmatprep.subr.mxu0 %v466
    %479 = vmatpush1.msra.mxu0 %v465
    %480 = vmatprep.subr.mxu0 0.0
    %481 = vmatpush1.msra.mxu0 0.0
    %482 = vmatprep.subr.mxu0 0.0
    %483 = vmatpush1.msra.mxu0 0.0
    %484 = vmatprep.subr.mxu0 0.0
    %485 = vmatpush1.msra.mxu0 0.0
    %486 = vmatprep.subr.mxu0 0.0
    %487 = vmatpush1.msra.mxu0 0.0
    %488 = vmatprep.subr.mxu0 0.0
    %489 = vmatpush1.msra.mxu0 0.0
    %490 = vmatprep.subr.mxu0 0.0
    %491 = vmatpush1.msra.mxu0 0.0
    %492 = vmatprep.subr.mxu0 0.0
    %493 = vmatpush1.msra.mxu0 0.0
    %494 = vmatprep.subr.mxu0 0.0
    %495 = vmatpush1.msra.mxu0 0.0
    %496 = vmatprep.subr.mxu0 0.0
    %497 = vmatpush1.msra.mxu0 0.0
    %498 = vmatprep.subr.mxu0 0.0
    %499 = vmatpush1.msra.mxu0 0.0
    %500 = vmatprep.subr.mxu0 0.0
    %501 = vmatpush1.msra.mxu0 0.0
    %502 = vmatprep.subr.mxu0 0.0
    %503 = vmatpush1.msra.mxu0 0.0
    %504 = vmatprep.subr.mxu0 0.0
    %505 = vmatpush1.msra.mxu0 0.0
    %506 = vmatprep.subr.mxu0 0.0
    %507 = vmatpush1.msra.mxu0 0.0
    %508 = vmatprep.subr.mxu0 0.0
    %509 = vmatpush1.msra.mxu0 0.0
    %510 = vmatprep.subr.mxu0 0.0
    %511 = vmatpush1.msra.mxu0 0.0
    %512 = vmatprep.subr.mxu0 0.0
    %513 = vmatpush1.msra.mxu0 0.0
    %514 = vmatprep.subr.mxu0 0.0
    %515 = vmatpush1.msra.mxu0 0.0
    %516 = vmatprep.subr.mxu0 0.0
    %517 = vmatpush1.msra.mxu0 0.0
    %518 = vmatprep.subr.mxu0 0.0
    %519 = vmatpush1.msra.mxu0 0.0
    %520 = vmatprep.subr.mxu0 0.0
    %521 = vmatpush1.msra.mxu0 0.0
    %522 = vmatprep.subr.mxu0 0.0
    %523 = vmatpush1.msra.mxu0 0.0
    %524 = vmatprep.subr.mxu0 0.0
    %525 = vmatpush1.msra.mxu0 0.0
    %526 = vmatprep.subr.mxu0 0.0
    %527 = vmatpush1.msra.mxu0 0.0
    %528 = vmatprep.subr.mxu0 0.0
    %529 = vmatpush1.msra.mxu0 0.0
    %530 = vmatprep.subr.mxu0 0.0
    %531 = vmatpush1.msra.mxu0 0.0
    %532 = vmatprep.subr.mxu0 0.0
    %533 = vmatpush1.msra.mxu0 0.0
    %534 = vmatprep.subr.mxu0 0.0
    %535 = vmatpush1.msra.mxu0 0.0
    %536 = vmatprep.mubr.f32.mxu0 0.0
    %537 = vmatmul.mubr.f32.gmra.mrb[0].mxu0 %v470
    %v538 = vpop.f32.mrb[0].mxu0
    %v539 = vadd.f32 0.0, %v538
    %v540 = vpop.f32.mrb[0].mxu0
    %v541 = vadd.f32 0.0, %v540
    %542 = vdwg.mxu0
    %v543 = vld [vmem:[#allocation3] sm:$0xff]
    %v544 = vld [vmem:[#allocation3 + $0x8] sm:$0xff]
    %v545 = vld [vmem:[#allocation3 + $0x10] sm:$0xff]
    %v546 = vld [vmem:[#allocation3 + $0x18] sm:$0xff]
    %v547 = vsel %vm243, %v451, 0
    %549 = vmatprep.subr.mxu0 0.0
    %550 = vmatpush1.msra.mxu0 %v543
    %551 = vmatprep.subr.mxu0 0.0
    %552 = vmatpush1.msra.mxu0 %v544
    %553 = vmatprep.subr.mxu0 0.0
    %554 = vmatpush1.msra.mxu0 %v545
    %555 = vmatprep.subr.mxu0 0.0
    %556 = vmatpush1.msra.mxu0 %v546
    %557 = vmatprep.subr.mxu0 0.0
    %558 = vmatpush1.msra.mxu0 0.0
    %559 = vmatprep.subr.mxu0 0.0
    %560 = vmatpush1.msra.mxu0 0.0
    %561 = vmatprep.subr.mxu0 0.0
    %562 = vmatpush1.msra.mxu0 0.0
    %563 = vmatprep.subr.mxu0 0.0
    %564 = vmatpush1.msra.mxu0 0.0
    %565 = vmatprep.subr.mxu0 0.0
    %566 = vmatpush1.msra.mxu0 0.0
    %567 = vmatprep.subr.mxu0 0.0
    %568 = vmatpush1.msra.mxu0 0.0
    %569 = vmatprep.subr.mxu0 0.0
    %570 = vmatpush1.msra.mxu0 0.0
    %571 = vmatprep.subr.mxu0 0.0
    %572 = vmatpush1.msra.mxu0 0.0
    %573 = vmatprep.subr.mxu0 0.0
    %574 = vmatpush1.msra.mxu0 0.0
    %575 = vmatprep.subr.mxu0 0.0
    %576 = vmatpush1.msra.mxu0 0.0
    %577 = vmatprep.subr.mxu0 0.0
    %578 = vmatpush1.msra.mxu0 0.0
    %579 = vmatprep.subr.mxu0 0.0
    %580 = vmatpush1.msra.mxu0 0.0
    %581 = vmatprep.subr.mxu0 0.0
    %582 = vmatpush1.msra.mxu0 0.0
    %583 = vmatprep.subr.mxu0 0.0
    %584 = vmatpush1.msra.mxu0 0.0
    %585 = vmatprep.subr.mxu0 0.0
    %586 = vmatpush1.msra.mxu0 0.0
    %587 = vmatprep.subr.mxu0 0.0
    %588 = vmatpush1.msra.mxu0 0.0
    %589 = vmatprep.subr.mxu0 0.0
    %590 = vmatpush1.msra.mxu0 0.0
    %591 = vmatprep.subr.mxu0 0.0
    %592 = vmatpush1.msra.mxu0 0.0
    %593 = vmatprep.subr.mxu0 0.0
    %594 = vmatpush1.msra.mxu0 0.0
    %595 = vmatprep.subr.mxu0 0.0
    %596 = vmatpush1.msra.mxu0 0.0
    %597 = vmatprep.subr.mxu0 0.0
    %598 = vmatpush1.msra.mxu0 0.0
    %599 = vmatprep.subr.mxu0 0.0
    %600 = vmatpush1.msra.mxu0 0.0
    %601 = vmatprep.subr.mxu0 0.0
    %602 = vmatpush1.msra.mxu0 0.0
    %603 = vmatprep.subr.mxu0 0.0
    %604 = vmatpush1.msra.mxu0 0.0
    %605 = vmatprep.subr.mxu0 0.0
    %606 = vmatpush1.msra.mxu0 0.0
    %607 = vmatprep.subr.mxu0 0.0
    %608 = vmatpush1.msra.mxu0 0.0
    %609 = vmatprep.subr.mxu0 0.0
    %610 = vmatpush1.msra.mxu0 0.0
    %611 = vmatprep.subr.mxu0 0.0
    %612 = vmatpush1.msra.mxu0 0.0
    %613 = vmatprep.mubr.f32.mxu0 0.0
    %614 = vmatmul.mubr.f32.gmra.mrb[0].mxu0 %v547
    %v615 = vpop.f32.mrb[0].mxu0
    %v616 = vadd.f32 0.0, %v615
    %v617 = vpop.f32.mrb[0].mxu0
    %618 = vdwg.mxu0
    %s619 = scalar_lea.vmem [#allocation2], 16
    %v620 = vld [vmem:[%s619] sm:$0xff]
    %v621 = vadd.f32 %v620, %v539
    %v622 = vadd.f32 %v199, %v541
    %v623 = vadd.f32 %v622, %v616
    %v624 = vtanh.pop %v621
    %v625 = vxor.u32 %v621, 2147483648
    %v626 = vmul.f32 %v625, 1.442695
    %v627 = vpow.pop %v626
    %v628 = vadd.f32 %v627, 1.0
    %v629 = vrcp.pop %v628
    %v630 = vmul.f32 1.0, %v629
    %v631 = vsel %vm205, %v624, %v630
    %v632 = vmul.f32 %v631, %v417
    %634 = vrot.lane.b32.xlu0 %v631, 64
    %v635 = vpop.permute.xlu0 %634
    %v637 = vmul.f32 %v631, %v635
    %639 = vrot.lane.b32.xlu0 %v637, 32
    %v640 = vpop.permute.xlu0 %639
    %v642 = vadd.f32 %v632, %v640
    %v643 = vtanh.pop %v642
    %645 = vrot.lane.b32.xlu0 %v643, 64
    %v646 = vpop.permute.xlu0 %645
    %v648 = vmul.f32 %v631, %v646
    %v649 = vtanh.pop %v623
    %v650 = vxor.u32 %v623, 2147483648
    %v651 = vmul.f32 %v650, 1.442695
    %v652 = vpow.pop %v651
    %v653 = vadd.f32 %v652, 1.0
    %v654 = vrcp.pop %v653
    %v655 = vmul.f32 1.0, %v654
    %v656 = vsel %vm205, %v649, %v655
    %v657 = vmul.f32 %v656, %v442
    %659 = vrot.lane.b32.xlu0 %v656, 64
    %v660 = vpop.permute.xlu0 %659
    %v662 = vmul.f32 %v656, %v660
    %664 = vrot.lane.b32.xlu0 %v662, 32
    %v665 = vpop.permute.xlu0 %664
    %v667 = vadd.f32 %v657, %v665
    %v668 = vtanh.pop %v667
    %670 = vrot.lane.b32.xlu0 %v668, 64
    %v671 = vpop.permute.xlu0 %670
    %v673 = vmul.f32 %v656, %v671
    %675 = vrot.lane.b32.xlu0 %v673, 32
    %v676 = vpop.permute.xlu0 %675
    %s678 = scalar_lea.vmem %s6, 8
    %679 = vst.msk [vmem:[%s678] sm:$0xff] %vm243, %v676
    %681 = vrot.lane.b32.xlu0 %v667, 96
    %v682 = vpop.permute.xlu0 %681
    %s684 = scalar_lea.vmem %s7, 8
    %685 = vst.msk [vmem:[%s684] sm:$0xff] %vm243, %v682
    %v686 = vld [vmem:[%s3] sm:$0xff]
    %v687 = vld [vmem:[%s3 + $0x8] sm:$0xff]
    %v688 = vld [vmem:[%s3 + $0x10] sm:$0xff]
    %v689 = vld [vmem:[%s3 + $0x18] sm:$0xff]
    %v690 = vld [vmem:[%s3 + $0x20] sm:$0xff]
    %v691 = vld [vmem:[%s3 + $0x28] sm:$0xff]
    %v692 = vld [vmem:[%s3 + $0x30] sm:$0xff]
    %v693 = vld [vmem:[%s3 + $0x38] sm:$0xff]
    %695 = vrot.lane.b32.xlu0 %v648, 32
    %v696 = vpop.permute.xlu0 %695
    %v697 = vsel %vm243, %v696, 0
    %699 = vmatprep.subr.mxu0 %v687
    %700 = vmatpush1.msra.mxu0 %v686
    %701 = vmatprep.subr.mxu0 %v689
    %702 = vmatpush1.msra.mxu0 %v688
    %703 = vmatprep.subr.mxu0 %v691
    %704 = vmatpush1.msra.mxu0 %v690
    %705 = vmatprep.subr.mxu0 %v693
    %706 = vmatpush1.msra.mxu0 %v692
    %707 = vmatprep.subr.mxu0 0.0
    %708 = vmatpush1.msra.mxu0 0.0
    %709 = vmatprep.subr.mxu0 0.0
    %710 = vmatpush1.msra.mxu0 0.0
    %711 = vmatprep.subr.mxu0 0.0
    %712 = vmatpush1.msra.mxu0 0.0
    %713 = vmatprep.subr.mxu0 0.0
    %714 = vmatpush1.msra.mxu0 0.0
    %715 = vmatprep.subr.mxu0 0.0
    %716 = vmatpush1.msra.mxu0 0.0
    %717 = vmatprep.subr.mxu0 0.0
    %718 = vmatpush1.msra.mxu0 0.0
    %719 = vmatprep.subr.mxu0 0.0
    %720 = vmatpush1.msra.mxu0 0.0
    %721 = vmatprep.subr.mxu0 0.0
    %722 = vmatpush1.msra.mxu0 0.0
    %723 = vmatprep.subr.mxu0 0.0
    %724 = vmatpush1.msra.mxu0 0.0
    %725 = vmatprep.subr.mxu0 0.0
    %726 = vmatpush1.msra.mxu0 0.0
    %727 = vmatprep.subr.mxu0 0.0
    %728 = vmatpush1.msra.mxu0 0.0
    %729 = vmatprep.subr.mxu0 0.0
    %730 = vmatpush1.msra.mxu0 0.0
    %731 = vmatprep.subr.mxu0 0.0
    %732 = vmatpush1.msra.mxu0 0.0
    %733 = vmatprep.subr.mxu0 0.0
    %734 = vmatpush1.msra.mxu0 0.0
    %735 = vmatprep.subr.mxu0 0.0
    %736 = vmatpush1.msra.mxu0 0.0
    %737 = vmatprep.subr.mxu0 0.0
    %738 = vmatpush1.msra.mxu0 0.0
    %739 = vmatprep.subr.mxu0 0.0
    %740 = vmatpush1.msra.mxu0 0.0
    %741 = vmatprep.subr.mxu0 0.0
    %742 = vmatpush1.msra.mxu0 0.0
    %743 = vmatprep.subr.mxu0 0.0
    %744 = vmatpush1.msra.mxu0 0.0
    %745 = vmatprep.subr.mxu0 0.0
    %746 = vmatpush1.msra.mxu0 0.0
    %747 = vmatprep.subr.mxu0 0.0
    %748 = vmatpush1.msra.mxu0 0.0
    %749 = vmatprep.subr.mxu0 0.0
    %750 = vmatpush1.msra.mxu0 0.0
    %751 = vmatprep.subr.mxu0 0.0
    %752 = vmatpush1.msra.mxu0 0.0
    %753 = vmatprep.subr.mxu0 0.0
    %754 = vmatpush1.msra.mxu0 0.0
    %755 = vmatprep.subr.mxu0 0.0
    %756 = vmatpush1.msra.mxu0 0.0
    %757 = vmatprep.subr.mxu0 0.0
    %758 = vmatpush1.msra.mxu0 0.0
    %759 = vmatprep.subr.mxu0 0.0
    %760 = vmatpush1.msra.mxu0 0.0
    %761 = vmatprep.subr.mxu0 0.0
    %762 = vmatpush1.msra.mxu0 0.0
    %763 = vmatprep.mubr.f32.mxu0 0.0
    %764 = vmatmul.mubr.f32.gmra.mrb[0].mxu0 %v697
    %v765 = vpop.f32.mrb[0].mxu0
    %v766 = vadd.f32 0.0, %v765
    %v767 = vpop.f32.mrb[0].mxu0
    %v768 = vadd.f32 0.0, %v767
    %769 = vdwg.mxu0
    %v770 = vld [vmem:[#allocation3] sm:$0xff]
    %v771 = vld [vmem:[#allocation3 + $0x8] sm:$0xff]
    %v772 = vld [vmem:[#allocation3 + $0x10] sm:$0xff]
    %v773 = vld [vmem:[#allocation3 + $0x18] sm:$0xff]
    %v774 = vsel %vm243, %v676, 0
    %776 = vmatprep.subr.mxu0 0.0
    %777 = vmatpush1.msra.mxu0 %v770
    %778 = vmatprep.subr.mxu0 0.0
    %779 = vmatpush1.msra.mxu0 %v771
    %780 = vmatprep.subr.mxu0 0.0
    %781 = vmatpush1.msra.mxu0 %v772
    %782 = vmatprep.subr.mxu0 0.0
    %783 = vmatpush1.msra.mxu0 %v773
    %784 = vmatprep.subr.mxu0 0.0
    %785 = vmatpush1.msra.mxu0 0.0
    %786 = vmatprep.subr.mxu0 0.0
    %787 = vmatpush1.msra.mxu0 0.0
    %788 = vmatprep.subr.mxu0 0.0
    %789 = vmatpush1.msra.mxu0 0.0
    %790 = vmatprep.subr.mxu0 0.0
    %791 = vmatpush1.msra.mxu0 0.0
    %792 = vmatprep.subr.mxu0 0.0
    %793 = vmatpush1.msra.mxu0 0.0
    %794 = vmatprep.subr.mxu0 0.0
    %795 = vmatpush1.msra.mxu0 0.0
    %796 = vmatprep.subr.mxu0 0.0
    %797 = vmatpush1.msra.mxu0 0.0
    %798 = vmatprep.subr.mxu0 0.0
    %799 = vmatpush1.msra.mxu0 0.0
    %800 = vmatprep.subr.mxu0 0.0
    %801 = vmatpush1.msra.mxu0 0.0
    %802 = vmatprep.subr.mxu0 0.0
    %803 = vmatpush1.msra.mxu0 0.0
    %804 = vmatprep.subr.mxu0 0.0
    %805 = vmatpush1.msra.mxu0 0.0
    %806 = vmatprep.subr.mxu0 0.0
    %807 = vmatpush1.msra.mxu0 0.0
    %808 = vmatprep.subr.mxu0 0.0
    %809 = vmatpush1.msra.mxu0 0.0
    %810 = vmatprep.subr.mxu0 0.0
    %811 = vmatpush1.msra.mxu0 0.0
    %812 = vmatprep.subr.mxu0 0.0
    %813 = vmatpush1.msra.mxu0 0.0
    %814 = vmatprep.subr.mxu0 0.0
    %815 = vmatpush1.msra.mxu0 0.0
    %816 = vmatprep.subr.mxu0 0.0
    %817 = vmatpush1.msra.mxu0 0.0
    %818 = vmatprep.subr.mxu0 0.0
    %819 = vmatpush1.msra.mxu0 0.0
    %820 = vmatprep.subr.mxu0 0.0
    %821 = vmatpush1.msra.mxu0 0.0
    %822 = vmatprep.subr.mxu0 0.0
    %823 = vmatpush1.msra.mxu0 0.0
    %824 = vmatprep.subr.mxu0 0.0
    %825 = vmatpush1.msra.mxu0 0.0
    %826 = vmatprep.subr.mxu0 0.0
    %827 = vmatpush1.msra.mxu0 0.0
    %828 = vmatprep.subr.mxu0 0.0
    %829 = vmatpush1.msra.mxu0 0.0
    %830 = vmatprep.subr.mxu0 0.0
    %831 = vmatpush1.msra.mxu0 0.0
    %832 = vmatprep.subr.mxu0 0.0
    %833 = vmatpush1.msra.mxu0 0.0
    %834 = vmatprep.subr.mxu0 0.0
    %835 = vmatpush1.msra.mxu0 0.0
    %836 = vmatprep.subr.mxu0 0.0
    %837 = vmatpush1.msra.mxu0 0.0
    %838 = vmatprep.subr.mxu0 0.0
    %839 = vmatpush1.msra.mxu0 0.0
    %840 = vmatprep.mubr.f32.mxu0 0.0
    %841 = vmatmul.mubr.f32.gmra.mrb[0].mxu0 %v774
    %v842 = vpop.f32.mrb[0].mxu0
    %v843 = vadd.f32 0.0, %v842
    %v844 = vpop.f32.mrb[0].mxu0
    %845 = vdwg.mxu0
    %s846 = scalar_lea.vmem [#allocation2], 24
    %v847 = vld [vmem:[%s846] sm:$0xff]
    %v848 = vadd.f32 %v847, %v766
    %v849 = vadd.f32 %v199, %v768
    %v850 = vadd.f32 %v849, %v843
    %v851 = vtanh.pop %v848
    %v852 = vxor.u32 %v848, 2147483648
    %v853 = vmul.f32 %v852, 1.442695
    %v854 = vpow.pop %v853
    %v855 = vadd.f32 %v854, 1.0
    %v856 = vrcp.pop %v855
    %v857 = vmul.f32 1.0, %v856
    %v858 = vsel %vm205, %v851, %v857
    %v859 = vmul.f32 %v858, %v642
    %861 = vrot.lane.b32.xlu0 %v858, 64
    %v862 = vpop.permute.xlu0 %861
    %v864 = vmul.f32 %v858, %v862
    %866 = vrot.lane.b32.xlu0 %v864, 32
    %v867 = vpop.permute.xlu0 %866
    %v869 = vadd.f32 %v859, %v867
    %v870 = vtanh.pop %v869
    %872 = vrot.lane.b32.xlu0 %v870, 64
    %v873 = vpop.permute.xlu0 %872
    %v875 = vmul.f32 %v858, %v873
    %v876 = vtanh.pop %v850
    %v877 = vxor.u32 %v850, 2147483648
    %v878 = vmul.f32 %v877, 1.442695
    %v879 = vpow.pop %v878
    %v880 = vadd.f32 %v879, 1.0
    %v881 = vrcp.pop %v880
    %v882 = vmul.f32 1.0, %v881
    %v883 = vsel %vm205, %v876, %v882
    %v884 = vmul.f32 %v883, %v667
    %886 = vrot.lane.b32.xlu0 %v883, 64
    %v887 = vpop.permute.xlu0 %886
    %v889 = vmul.f32 %v883, %v887
    %891 = vrot.lane.b32.xlu0 %v889, 32
    %v892 = vpop.permute.xlu0 %891
    %v894 = vadd.f32 %v884, %v892
    %v895 = vtanh.pop %v894
    %897 = vrot.lane.b32.xlu0 %v895, 64
    %v898 = vpop.permute.xlu0 %897
    %v900 = vmul.f32 %v883, %v898
    %902 = vrot.lane.b32.xlu0 %v900, 32
    %v903 = vpop.permute.xlu0 %902
    %s905 = scalar_lea.vmem %s6, 16
    %906 = vst.msk [vmem:[%s905] sm:$0xff] %vm243, %v903
    %908 = vrot.lane.b32.xlu0 %v894, 96
    %v909 = vpop.permute.xlu0 %908
    %s911 = scalar_lea.vmem %s7, 16
    %912 = vst.msk [vmem:[%s911] sm:$0xff] %vm243, %v909
    %v913 = vld [vmem:[%s3] sm:$0xff]
    %v914 = vld [vmem:[%s3 + $0x8] sm:$0xff]
    %v915 = vld [vmem:[%s3 + $0x10] sm:$0xff]
    %v916 = vld [vmem:[%s3 + $0x18] sm:$0xff]
    %v917 = vld [vmem:[%s3 + $0x20] sm:$0xff]
    %v918 = vld [vmem:[%s3 + $0x28] sm:$0xff]
    %v919 = vld [vmem:[%s3 + $0x30] sm:$0xff]
    %v920 = vld [vmem:[%s3 + $0x38] sm:$0xff]
    %922 = vrot.lane.b32.xlu0 %v875, 32
    %v923 = vpop.permute.xlu0 %922
    %v924 = vsel %vm243, %v923, 0
    %926 = vmatprep.subr.mxu0 %v914
    %927 = vmatpush1.msra.mxu0 %v913
    %928 = vmatprep.subr.mxu0 %v916
    %929 = vmatpush1.msra.mxu0 %v915
    %930 = vmatprep.subr.mxu0 %v918
    %931 = vmatpush1.msra.mxu0 %v917
    %932 = vmatprep.subr.mxu0 %v920
    %933 = vmatpush1.msra.mxu0 %v919
    %934 = vmatprep.subr.mxu0 0.0
    %935 = vmatpush1.msra.mxu0 0.0
    %936 = vmatprep.subr.mxu0 0.0
    %937 = vmatpush1.msra.mxu0 0.0
    %938 = vmatprep.subr.mxu0 0.0
    %939 = vmatpush1.msra.mxu0 0.0
    %940 = vmatprep.subr.mxu0 0.0
    %941 = vmatpush1.msra.mxu0 0.0
    %942 = vmatprep.subr.mxu0 0.0
    %943 = vmatpush1.msra.mxu0 0.0
    %944 = vmatprep.subr.mxu0 0.0
    %945 = vmatpush1.msra.mxu0 0.0
    %946 = vmatprep.subr.mxu0 0.0
    %947 = vmatpush1.msra.mxu0 0.0
    %948 = vmatprep.subr.mxu0 0.0
    %949 = vmatpush1.msra.mxu0 0.0
    %950 = vmatprep.subr.mxu0 0.0
    %951 = vmatpush1.msra.mxu0 0.0
    %952 = vmatprep.subr.mxu0 0.0
    %953 = vmatpush1.msra.mxu0 0.0
    %954 = vmatprep.subr.mxu0 0.0
    %955 = vmatpush1.msra.mxu0 0.0
    %956 = vmatprep.subr.mxu0 0.0
    %957 = vmatpush1.msra.mxu0 0.0
    %958 = vmatprep.subr.mxu0 0.0
    %959 = vmatpush1.msra.mxu0 0.0
    %960 = vmatprep.subr.mxu0 0.0
    %961 = vmatpush1.msra.mxu0 0.0
    %962 = vmatprep.subr.mxu0 0.0
    %963 = vmatpush1.msra.mxu0 0.0
    %964 = vmatprep.subr.mxu0 0.0
    %965 = vmatpush1.msra.mxu0 0.0
    %966 = vmatprep.subr.mxu0 0.0
    %967 = vmatpush1.msra.mxu0 0.0
    %968 = vmatprep.subr.mxu0 0.0
    %969 = vmatpush1.msra.mxu0 0.0
    %970 = vmatprep.subr.mxu0 0.0
    %971 = vmatpush1.msra.mxu0 0.0
    %972 = vmatprep.subr.mxu0 0.0
    %973 = vmatpush1.msra.mxu0 0.0
    %974 = vmatprep.subr.mxu0 0.0
    %975 = vmatpush1.msra.mxu0 0.0
    %976 = vmatprep.subr.mxu0 0.0
    %977 = vmatpush1.msra.mxu0 0.0
    %978 = vmatprep.subr.mxu0 0.0
    %979 = vmatpush1.msra.mxu0 0.0
    %980 = vmatprep.subr.mxu0 0.0
    %981 = vmatpush1.msra.mxu0 0.0
    %982 = vmatprep.subr.mxu0 0.0
    %983 = vmatpush1.msra.mxu0 0.0
    %984 = vmatprep.subr.mxu0 0.0
    %985 = vmatpush1.msra.mxu0 0.0
    %986 = vmatprep.subr.mxu0 0.0
    %987 = vmatpush1.msra.mxu0 0.0
    %988 = vmatprep.subr.mxu0 0.0
    %989 = vmatpush1.msra.mxu0 0.0
    %990 = vmatprep.mubr.f32.mxu0 0.0
    %991 = vmatmul.mubr.f32.gmra.mrb[0].mxu0 %v924
    %v992 = vpop.f32.mrb[0].mxu0
    %v993 = vadd.f32 0.0, %v992
    %v994 = vpop.f32.mrb[0].mxu0
    %v995 = vadd.f32 0.0, %v994
    %996 = vdwg.mxu0
    %v997 = vld [vmem:[#allocation3] sm:$0xff]
    %v998 = vld [vmem:[#allocation3 + $0x8] sm:$0xff]
    %v999 = vld [vmem:[#allocation3 + $0x10] sm:$0xff]
    %v1000 = vld [vmem:[#allocation3 + $0x18] sm:$0xff]
    %v1001 = vsel %vm243, %v903, 0
    %1003 = vmatprep.subr.mxu0 0.0
    %1004 = vmatpush1.msra.mxu0 %v997
    %1005 = vmatprep.subr.mxu0 0.0
    %1006 = vmatpush1.msra.mxu0 %v998
    %1007 = vmatprep.subr.mxu0 0.0
    %1008 = vmatpush1.msra.mxu0 %v999
    %1009 = vmatprep.subr.mxu0 0.0
    %1010 = vmatpush1.msra.mxu0 %v1000
    %1011 = vmatprep.subr.mxu0 0.0
    %1012 = vmatpush1.msra.mxu0 0.0
    %1013 = vmatprep.subr.mxu0 0.0
    %1014 = vmatpush1.msra.mxu0 0.0
    %1015 = vmatprep.subr.mxu0 0.0
    %1016 = vmatpush1.msra.mxu0 0.0
    %1017 = vmatprep.subr.mxu0 0.0
    %1018 = vmatpush1.msra.mxu0 0.0
    %1019 = vmatprep.subr.mxu0 0.0
    %1020 = vmatpush1.msra.mxu0 0.0
    %1021 = vmatprep.subr.mxu0 0.0
    %1022 = vmatpush1.msra.mxu0 0.0
    %1023 = vmatprep.subr.mxu0 0.0
    %1024 = vmatpush1.msra.mxu0 0.0
    %1025 = vmatprep.subr.mxu0 0.0
    %1026 = vmatpush1.msra.mxu0 0.0
    %1027 = vmatprep.subr.mxu0 0.0
    %1028 = vmatpush1.msra.mxu0 0.0
    %1029 = vmatprep.subr.mxu0 0.0
    %1030 = vmatpush1.msra.mxu0 0.0
    %1031 = vmatprep.subr.mxu0 0.0
    %1032 = vmatpush1.msra.mxu0 0.0
    %1033 = vmatprep.subr.mxu0 0.0
    %1034 = vmatpush1.msra.mxu0 0.0
    %1035 = vmatprep.subr.mxu0 0.0
    %1036 = vmatpush1.msra.mxu0 0.0
    %1037 = vmatprep.subr.mxu0 0.0
    %1038 = vmatpush1.msra.mxu0 0.0
    %1039 = vmatprep.subr.mxu0 0.0
    %1040 = vmatpush1.msra.mxu0 0.0
    %1041 = vmatprep.subr.mxu0 0.0
    %1042 = vmatpush1.msra.mxu0 0.0
    %1043 = vmatprep.subr.mxu0 0.0
    %1044 = vmatpush1.msra.mxu0 0.0
    %1045 = vmatprep.subr.mxu0 0.0
    %1046 = vmatpush1.msra.mxu0 0.0
    %1047 = vmatprep.subr.mxu0 0.0
    %1048 = vmatpush1.msra.mxu0 0.0
    %1049 = vmatprep.subr.mxu0 0.0
    %1050 = vmatpush1.msra.mxu0 0.0
    %1051 = vmatprep.subr.mxu0 0.0
    %1052 = vmatpush1.msra.mxu0 0.0
    %1053 = vmatprep.subr.mxu0 0.0
    %1054 = vmatpush1.msra.mxu0 0.0
    %1055 = vmatprep.subr.mxu0 0.0
    %1056 = vmatpush1.msra.mxu0 0.0
    %1057 = vmatprep.subr.mxu0 0.0
    %1058 = vmatpush1.msra.mxu0 0.0
    %1059 = vmatprep.subr.mxu0 0.0
    %1060 = vmatpush1.msra.mxu0 0.0
    %1061 = vmatprep.subr.mxu0 0.0
    %1062 = vmatpush1.msra.mxu0 0.0
    %1063 = vmatprep.subr.mxu0 0.0
    %1064 = vmatpush1.msra.mxu0 0.0
    %1065 = vmatprep.subr.mxu0 0.0
    %1066 = vmatpush1.msra.mxu0 0.0
    %1067 = vmatprep.mubr.f32.mxu0 0.0
    %1068 = vmatmul.mubr.f32.gmra.mrb[0].mxu0 %v1001
    %v1069 = vpop.f32.mrb[0].mxu0
    %v1070 = vadd.f32 0.0, %v1069
    %v1071 = vpop.f32.mrb[0].mxu0
    %1072 = vdwg.mxu0
    %s1073 = scalar_lea.vmem [#allocation2], 32
    %v1074 = vld [vmem:[%s1073] sm:$0xff]
    %v1075 = vadd.f32 %v1074, %v993
    %v1076 = vadd.f32 %v199, %v995
    %v1077 = vadd.f32 %v1076, %v1070
    %v1078 = vtanh.pop %v1075
    %v1079 = vxor.u32 %v1075, 2147483648
    %v1080 = vmul.f32 %v1079, 1.442695
    %v1081 = vpow.pop %v1080
    %v1082 = vadd.f32 %v1081, 1.0
    %v1083 = vrcp.pop %v1082
    %v1084 = vmul.f32 1.0, %v1083
    %v1085 = vsel %vm205, %v1078, %v1084
    %v1086 = vmul.f32 %v1085, %v869
    %1088 = vrot.lane.b32.xlu0 %v1085, 64
    %v1089 = vpop.permute.xlu0 %1088
    %v1091 = vmul.f32 %v1085, %v1089
    %1093 = vrot.lane.b32.xlu0 %v1091, 32
    %v1094 = vpop.permute.xlu0 %1093
    %v1096 = vadd.f32 %v1086, %v1094
    %v1097 = vtanh.pop %v1096
    %1099 = vrot.lane.b32.xlu0 %v1097, 64
    %v1100 = vpop.permute.xlu0 %1099
    %v1102 = vmul.f32 %v1085, %v1100
    %v1103 = vtanh.pop %v1077
    %v1104 = vxor.u32 %v1077, 2147483648
    %v1105 = vmul.f32 %v1104, 1.442695
    %v1106 = vpow.pop %v1105
    %v1107 = vadd.f32 %v1106, 1.0
    %v1108 = vrcp.pop %v1107
    %v1109 = vmul.f32 1.0, %v1108
    %v1110 = vsel %vm205, %v1103, %v1109
    %v1111 = vmul.f32 %v1110, %v894
    %1113 = vrot.lane.b32.xlu0 %v1110, 64
    %v1114 = vpop.permute.xlu0 %1113
    %v1116 = vmul.f32 %v1110, %v1114
    %1118 = vrot.lane.b32.xlu0 %v1116, 32
    %v1119 = vpop.permute.xlu0 %1118
    %v1121 = vadd.f32 %v1111, %v1119
    %v1122 = vtanh.pop %v1121
    %1124 = vrot.lane.b32.xlu0 %v1122, 64
    %v1125 = vpop.permute.xlu0 %1124
    %v1127 = vmul.f32 %v1110, %v1125
    %1129 = vrot.lane.b32.xlu0 %v1127, 32
    %v1130 = vpop.permute.xlu0 %1129
    %s1132 = scalar_lea.vmem %s6, 24
    %1133 = vst.msk [vmem:[%s1132] sm:$0xff] %vm243, %v1130
    %1135 = vrot.lane.b32.xlu0 %v1121, 96
    %v1136 = vpop.permute.xlu0 %1135
    %s1138 = scalar_lea.vmem %s7, 24
    %1139 = vst.msk [vmem:[%s1138] sm:$0xff] %vm243, %v1136
    %v1140 = vld [vmem:[%s3] sm:$0xff]
    %v1141 = vld [vmem:[%s3 + $0x8] sm:$0xff]
    %v1142 = vld [vmem:[%s3 + $0x10] sm:$0xff]
    %v1143 = vld [vmem:[%s3 + $0x18] sm:$0xff]
    %v1144 = vld [vmem:[%s3 + $0x20] sm:$0xff]
    %v1145 = vld [vmem:[%s3 + $0x28] sm:$0xff]
    %v1146 = vld [vmem:[%s3 + $0x30] sm:$0xff]
    %v1147 = vld [vmem:[%s3 + $0x38] sm:$0xff]
    %1149 = vrot.lane.b32.xlu0 %v1102, 32
    %v1150 = vpop.permute.xlu0 %1149
    %v1151 = vsel %vm243, %v1150, 0
    %1153 = vmatprep.subr.mxu0 %v1141
    %1154 = vmatpush1.msra.mxu0 %v1140
    %1155 = vmatprep.subr.mxu0 %v1143
    %1156 = vmatpush1.msra.mxu0 %v1142
    %1157 = vmatprep.subr.mxu0 %v1145
    %1158 = vmatpush1.msra.mxu0 %v1144
    %1159 = vmatprep.subr.mxu0 %v1147
    %1160 = vmatpush1.msra.mxu0 %v1146
    %1161 = vmatprep.subr.mxu0 0.0
    %1162 = vmatpush1.msra.mxu0 0.0
    %1163 = vmatprep.subr.mxu0 0.0
    %1164 = vmatpush1.msra.mxu0 0.0
    %1165 = vmatprep.subr.mxu0 0.0
    %1166 = vmatpush1.msra.mxu0 0.0
    %1167 = vmatprep.subr.mxu0 0.0
    %1168 = vmatpush1.msra.mxu0 0.0
    %1169 = vmatprep.subr.mxu0 0.0
    %1170 = vmatpush1.msra.mxu0 0.0
    %1171 = vmatprep.subr.mxu0 0.0
    %1172 = vmatpush1.msra.mxu0 0.0
    %1173 = vmatprep.subr.mxu0 0.0
    %1174 = vmatpush1.msra.mxu0 0.0
    %1175 = vmatprep.subr.mxu0 0.0
    %1176 = vmatpush1.msra.mxu0 0.0
    %1177 = vmatprep.subr.mxu0 0.0
    %1178 = vmatpush1.msra.mxu0 0.0
    %1179 = vmatprep.subr.mxu0 0.0
    %1180 = vmatpush1.msra.mxu0 0.0
    %1181 = vmatprep.subr.mxu0 0.0
    %1182 = vmatpush1.msra.mxu0 0.0
    %1183 = vmatprep.subr.mxu0 0.0
    %1184 = vmatpush1.msra.mxu0 0.0
    %1185 = vmatprep.subr.mxu0 0.0
    %1186 = vmatpush1.msra.mxu0 0.0
    %1187 = vmatprep.subr.mxu0 0.0
    %1188 = vmatpush1.msra.mxu0 0.0
    %1189 = vmatprep.subr.mxu0 0.0
    %1190 = vmatpush1.msra.mxu0 0.0
    %1191 = vmatprep.subr.mxu0 0.0
    %1192 = vmatpush1.msra.mxu0 0.0
    %1193 = vmatprep.subr.mxu0 0.0
    %1194 = vmatpush1.msra.mxu0 0.0
    %1195 = vmatprep.subr.mxu0 0.0
    %1196 = vmatpush1.msra.mxu0 0.0
    %1197 = vmatprep.subr.mxu0 0.0
    %1198 = vmatpush1.msra.mxu0 0.0
    %1199 = vmatprep.subr.mxu0 0.0
    %1200 = vmatpush1.msra.mxu0 0.0
    %1201 = vmatprep.subr.mxu0 0.0
    %1202 = vmatpush1.msra.mxu0 0.0
    %1203 = vmatprep.subr.mxu0 0.0
    %1204 = vmatpush1.msra.mxu0 0.0
    %1205 = vmatprep.subr.mxu0 0.0
    %1206 = vmatpush1.msra.mxu0 0.0
    %1207 = vmatprep.subr.mxu0 0.0
    %1208 = vmatpush1.msra.mxu0 0.0
    %1209 = vmatprep.subr.mxu0 0.0
    %1210 = vmatpush1.msra.mxu0 0.0
    %1211 = vmatprep.subr.mxu0 0.0
    %1212 = vmatpush1.msra.mxu0 0.0
    %1213 = vmatprep.subr.mxu0 0.0
    %1214 = vmatpush1.msra.mxu0 0.0
    %1215 = vmatprep.subr.mxu0 0.0
    %1216 = vmatpush1.msra.mxu0 0.0
    %1217 = vmatprep.mubr.f32.mxu0 0.0
    %1218 = vmatmul.mubr.f32.gmra.mrb[0].mxu0 %v1151
    %v1219 = vpop.f32.mrb[0].mxu0
    %v1220 = vadd.f32 0.0, %v1219
    %v1221 = vpop.f32.mrb[0].mxu0
    %v1222 = vadd.f32 0.0, %v1221
    %1223 = vdwg.mxu0
    %v1224 = vld [vmem:[#allocation3] sm:$0xff]
    %v1225 = vld [vmem:[#allocation3 + $0x8] sm:$0xff]
    %v1226 = vld [vmem:[#allocation3 + $0x10] sm:$0xff]
    %v1227 = vld [vmem:[#allocation3 + $0x18] sm:$0xff]
    %v1228 = vsel %vm243, %v1130, 0
    %1230 = vmatprep.subr.mxu0 0.0
    %1231 = vmatpush1.msra.mxu0 %v1224
    %1232 = vmatprep.subr.mxu0 0.0
    %1233 = vmatpush1.msra.mxu0 %v1225
    %1234 = vmatprep.subr.mxu0 0.0
    %1235 = vmatpush1.msra.mxu0 %v1226
    %1236 = vmatprep.subr.mxu0 0.0
    %1237 = vmatpush1.msra.mxu0 %v1227
    %1238 = vmatprep.subr.mxu0 0.0
    %1239 = vmatpush1.msra.mxu0 0.0
    %1240 = vmatprep.subr.mxu0 0.0
    %1241 = vmatpush1.msra.mxu0 0.0
    %1242 = vmatprep.subr.mxu0 0.0
    %1243 = vmatpush1.msra.mxu0 0.0
    %1244 = vmatprep.subr.mxu0 0.0
    %1245 = vmatpush1.msra.mxu0 0.0
    %1246 = vmatprep.subr.mxu0 0.0
    %1247 = vmatpush1.msra.mxu0 0.0
    %1248 = vmatprep.subr.mxu0 0.0
    %1249 = vmatpush1.msra.mxu0 0.0
    %1250 = vmatprep.subr.mxu0 0.0
    %1251 = vmatpush1.msra.mxu0 0.0
    %1252 = vmatprep.subr.mxu0 0.0
    %1253 = vmatpush1.msra.mxu0 0.0
    %1254 = vmatprep.subr.mxu0 0.0
    %1255 = vmatpush1.msra.mxu0 0.0
    %1256 = vmatprep.subr.mxu0 0.0
    %1257 = vmatpush1.msra.mxu0 0.0
    %1258 = vmatprep.subr.mxu0 0.0
    %1259 = vmatpush1.msra.mxu0 0.0
    %1260 = vmatprep.subr.mxu0 0.0
    %1261 = vmatpush1.msra.mxu0 0.0
    %1262 = vmatprep.subr.mxu0 0.0
    %1263 = vmatpush1.msra.mxu0 0.0
    %1264 = vmatprep.subr.mxu0 0.0
    %1265 = vmatpush1.msra.mxu0 0.0
    %1266 = vmatprep.subr.mxu0 0.0
    %1267 = vmatpush1.msra.mxu0 0.0
    %1268 = vmatprep.subr.mxu0 0.0
    %1269 = vmatpush1.msra.mxu0 0.0
    %1270 = vmatprep.subr.mxu0 0.0
    %1271 = vmatpush1.msra.mxu0 0.0
    %1272 = vmatprep.subr.mxu0 0.0
    %1273 = vmatpush1.msra.mxu0 0.0
    %1274 = vmatprep.subr.mxu0 0.0
    %1275 = vmatpush1.msra.mxu0 0.0
    %1276 = vmatprep.subr.mxu0 0.0
    %1277 = vmatpush1.msra.mxu0 0.0
    %1278 = vmatprep.subr.mxu0 0.0
    %1279 = vmatpush1.msra.mxu0 0.0
    %1280 = vmatprep.subr.mxu0 0.0
    %1281 = vmatpush1.msra.mxu0 0.0
    %1282 = vmatprep.subr.mxu0 0.0
    %1283 = vmatpush1.msra.mxu0 0.0
    %1284 = vmatprep.subr.mxu0 0.0
    %1285 = vmatpush1.msra.mxu0 0.0
    %1286 = vmatprep.subr.mxu0 0.0
    %1287 = vmatpush1.msra.mxu0 0.0
    %1288 = vmatprep.subr.mxu0 0.0
    %1289 = vmatpush1.msra.mxu0 0.0
    %1290 = vmatprep.subr.mxu0 0.0
    %1291 = vmatpush1.msra.mxu0 0.0
    %1292 = vmatprep.subr.mxu0 0.0
    %1293 = vmatpush1.msra.mxu0 0.0
    %1294 = vmatprep.mubr.f32.mxu0 0.0
    %1295 = vmatmul.mubr.f32.gmra.mrb[0].mxu0 %v1228
    %v1296 = vpop.f32.mrb[0].mxu0
    %v1297 = vadd.f32 0.0, %v1296
    %v1298 = vpop.f32.mrb[0].mxu0
    %1299 = vdwg.mxu0
    %s1300 = scalar_lea.vmem [#allocation2], 40
    %v1301 = vld [vmem:[%s1300] sm:$0xff]
    %v1302 = vadd.f32 %v1301, %v1220
    %v1303 = vadd.f32 %v199, %v1222
    %v1304 = vadd.f32 %v1303, %v1297
    %v1305 = vtanh.pop %v1302
    %v1306 = vxor.u32 %v1302, 2147483648
    %v1307 = vmul.f32 %v1306, 1.442695
    %v1308 = vpow.pop %v1307
    %v1309 = vadd.f32 %v1308, 1.0
    %v1310 = vrcp.pop %v1309
    %v1311 = vmul.f32 1.0, %v1310
    %v1312 = vsel %vm205, %v1305, %v1311
    %v1313 = vmul.f32 %v1312, %v1096
    %1315 = vrot.lane.b32.xlu0 %v1312, 64
    %v1316 = vpop.permute.xlu0 %1315
    %v1318 = vmul.f32 %v1312, %v1316
    %1320 = vrot.lane.b32.xlu0 %v1318, 32
    %v1321 = vpop.permute.xlu0 %1320
    %v1323 = vadd.f32 %v1313, %v1321
    %v1324 = vtanh.pop %v1323
    %1326 = vrot.lane.b32.xlu0 %v1324, 64
    %v1327 = vpop.permute.xlu0 %1326
    %v1329 = vmul.f32 %v1312, %v1327
    %v1330 = vtanh.pop %v1304
    %v1331 = vxor.u32 %v1304, 2147483648
    %v1332 = vmul.f32 %v1331, 1.442695
    %v1333 = vpow.pop %v1332
    %v1334 = vadd.f32 %v1333, 1.0
    %v1335 = vrcp.pop %v1334
    %v1336 = vmul.f32 1.0, %v1335
    %v1337 = vsel %vm205, %v1330, %v1336
    %v1338 = vmul.f32 %v1337, %v1121
    %1340 = vrot.lane.b32.xlu0 %v1337, 64
    %v1341 = vpop.permute.xlu0 %1340
    %v1343 = vmul.f32 %v1337, %v1341
    %1345 = vrot.lane.b32.xlu0 %v1343, 32
    %v1346 = vpop.permute.xlu0 %1345
    %v1348 = vadd.f32 %v1338, %v1346
    %v1349 = vtanh.pop %v1348
    %1351 = vrot.lane.b32.xlu0 %v1349, 64
    %v1352 = vpop.permute.xlu0 %1351
    %v1354 = vmul.f32 %v1337, %v1352
    %1356 = vrot.lane.b32.xlu0 %v1354, 32
    %v1357 = vpop.permute.xlu0 %1356
    %s1359 = scalar_lea.vmem %s6, 32
    %1360 = vst.msk [vmem:[%s1359] sm:$0xff] %vm243, %v1357
    %1362 = vrot.lane.b32.xlu0 %v1348, 96
    %v1363 = vpop.permute.xlu0 %1362
    %s1365 = scalar_lea.vmem %s7, 32
    %1366 = vst.msk [vmem:[%s1365] sm:$0xff] %vm243, %v1363
    %v1367 = vld [vmem:[%s3] sm:$0xff]
    %v1368 = vld [vmem:[%s3 + $0x8] sm:$0xff]
    %v1369 = vld [vmem:[%s3 + $0x10] sm:$0xff]
    %v1370 = vld [vmem:[%s3 + $0x18] sm:$0xff]
    %v1371 = vld [vmem:[%s3 + $0x20] sm:$0xff]
    %v1372 = vld [vmem:[%s3 + $0x28] sm:$0xff]
    %v1373 = vld [vmem:[%s3 + $0x30] sm:$0xff]
    %v1374 = vld [vmem:[%s3 + $0x38] sm:$0xff]
    %1376 = vrot.lane.b32.xlu0 %v1329, 32
    %v1377 = vpop.permute.xlu0 %1376
    %v1378 = vsel %vm243, %v1377, 0
    %1380 = vmatprep.subr.mxu0 %v1368
    %1381 = vmatpush1.msra.mxu0 %v1367
    %1382 = vmatprep.subr.mxu0 %v1370
    %1383 = vmatpush1.msra.mxu0 %v1369
    %1384 = vmatprep.subr.mxu0 %v1372
    %1385 = vmatpush1.msra.mxu0 %v1371
    %1386 = vmatprep.subr.mxu0 %v1374
    %1387 = vmatpush1.msra.mxu0 %v1373
    %1388 = vmatprep.subr.mxu0 0.0
    %1389 = vmatpush1.msra.mxu0 0.0
    %1390 = vmatprep.subr.mxu0 0.0
    %1391 = vmatpush1.msra.mxu0 0.0
    %1392 = vmatprep.subr.mxu0 0.0
    %1393 = vmatpush1.msra.mxu0 0.0
    %1394 = vmatprep.subr.mxu0 0.0
    %1395 = vmatpush1.msra.mxu0 0.0
    %1396 = vmatprep.subr.mxu0 0.0
    %1397 = vmatpush1.msra.mxu0 0.0
    %1398 = vmatprep.subr.mxu0 0.0
    %1399 = vmatpush1.msra.mxu0 0.0
    %1400 = vmatprep.subr.mxu0 0.0
    %1401 = vmatpush1.msra.mxu0 0.0
    %1402 = vmatprep.subr.mxu0 0.0
    %1403 = vmatpush1.msra.mxu0 0.0
    %1404 = vmatprep.subr.mxu0 0.0
    %1405 = vmatpush1.msra.mxu0 0.0
    %1406 = vmatprep.subr.mxu0 0.0
    %1407 = vmatpush1.msra.mxu0 0.0
    %1408 = vmatprep.subr.mxu0 0.0
    %1409 = vmatpush1.msra.mxu0 0.0
    %1410 = vmatprep.subr.mxu0 0.0
    %1411 = vmatpush1.msra.mxu0 0.0
    %1412 = vmatprep.subr.mxu0 0.0
    %1413 = vmatpush1.msra.mxu0 0.0
    %1414 = vmatprep.subr.mxu0 0.0
    %1415 = vmatpush1.msra.mxu0 0.0
    %1416 = vmatprep.subr.mxu0 0.0
    %1417 = vmatpush1.msra.mxu0 0.0
    %1418 = vmatprep.subr.mxu0 0.0
    %1419 = vmatpush1.msra.mxu0 0.0
    %1420 = vmatprep.subr.mxu0 0.0
    %1421 = vmatpush1.msra.mxu0 0.0
    %1422 = vmatprep.subr.mxu0 0.0
    %1423 = vmatpush1.msra.mxu0 0.0
    %1424 = vmatprep.subr.mxu0 0.0
    %1425 = vmatpush1.msra.mxu0 0.0
    %1426 = vmatprep.subr.mxu0 0.0
    %1427 = vmatpush1.msra.mxu0 0.0
    %1428 = vmatprep.subr.mxu0 0.0
    %1429 = vmatpush1.msra.mxu0 0.0
    %1430 = vmatprep.subr.mxu0 0.0
    %1431 = vmatpush1.msra.mxu0 0.0
    %1432 = vmatprep.subr.mxu0 0.0
    %1433 = vmatpush1.msra.mxu0 0.0
    %1434 = vmatprep.subr.mxu0 0.0
    %1435 = vmatpush1.msra.mxu0 0.0
    %1436 = vmatprep.subr.mxu0 0.0
    %1437 = vmatpush1.msra.mxu0 0.0
    %1438 = vmatprep.subr.mxu0 0.0
    %1439 = vmatpush1.msra.mxu0 0.0
    %1440 = vmatprep.subr.mxu0 0.0
    %1441 = vmatpush1.msra.mxu0 0.0
    %1442 = vmatprep.subr.mxu0 0.0
    %1443 = vmatpush1.msra.mxu0 0.0
    %1444 = vmatprep.mubr.f32.mxu0 0.0
    %1445 = vmatmul.mubr.f32.gmra.mrb[0].mxu0 %v1378
    %v1446 = vpop.f32.mrb[0].mxu0
    %v1447 = vadd.f32 0.0, %v1446
    %v1448 = vpop.f32.mrb[0].mxu0
    %v1449 = vadd.f32 0.0, %v1448
    %1450 = vdwg.mxu0
    %v1451 = vld [vmem:[#allocation3] sm:$0xff]
    %v1452 = vld [vmem:[#allocation3 + $0x8] sm:$0xff]
    %v1453 = vld [vmem:[#allocation3 + $0x10] sm:$0xff]
    %v1454 = vld [vmem:[#allocation3 + $0x18] sm:$0xff]
    %v1455 = vsel %vm243, %v1357, 0
    %1457 = vmatprep.subr.mxu0 0.0
    %1458 = vmatpush1.msra.mxu0 %v1451
    %1459 = vmatprep.subr.mxu0 0.0
    %1460 = vmatpush1.msra.mxu0 %v1452
    %1461 = vmatprep.subr.mxu0 0.0
    %1462 = vmatpush1.msra.mxu0 %v1453
    %1463 = vmatprep.subr.mxu0 0.0
    %1464 = vmatpush1.msra.mxu0 %v1454
    %1465 = vmatprep.subr.mxu0 0.0
    %1466 = vmatpush1.msra.mxu0 0.0
    %1467 = vmatprep.subr.mxu0 0.0
    %1468 = vmatpush1.msra.mxu0 0.0
    %1469 = vmatprep.subr.mxu0 0.0
    %1470 = vmatpush1.msra.mxu0 0.0
    %1471 = vmatprep.subr.mxu0 0.0
    %1472 = vmatpush1.msra.mxu0 0.0
    %1473 = vmatprep.subr.mxu0 0.0
    %1474 = vmatpush1.msra.mxu0 0.0
    %1475 = vmatprep.subr.mxu0 0.0
    %1476 = vmatpush1.msra.mxu0 0.0
    %1477 = vmatprep.subr.mxu0 0.0
    %1478 = vmatpush1.msra.mxu0 0.0
    %1479 = vmatprep.subr.mxu0 0.0
    %1480 = vmatpush1.msra.mxu0 0.0
    %1481 = vmatprep.subr.mxu0 0.0
    %1482 = vmatpush1.msra.mxu0 0.0
    %1483 = vmatprep.subr.mxu0 0.0
    %1484 = vmatpush1.msra.mxu0 0.0
    %1485 = vmatprep.subr.mxu0 0.0
    %1486 = vmatpush1.msra.mxu0 0.0
    %1487 = vmatprep.subr.mxu0 0.0
    %1488 = vmatpush1.msra.mxu0 0.0
    %1489 = vmatprep.subr.mxu0 0.0
    %1490 = vmatpush1.msra.mxu0 0.0
    %1491 = vmatprep.subr.mxu0 0.0
    %1492 = vmatpush1.msra.mxu0 0.0
    %1493 = vmatprep.subr.mxu0 0.0
    %1494 = vmatpush1.msra.mxu0 0.0
    %1495 = vmatprep.subr.mxu0 0.0
    %1496 = vmatpush1.msra.mxu0 0.0
    %1497 = vmatprep.subr.mxu0 0.0
    %1498 = vmatpush1.msra.mxu0 0.0
    %1499 = vmatprep.subr.mxu0 0.0
    %1500 = vmatpush1.msra.mxu0 0.0
    %1501 = vmatprep.subr.mxu0 0.0
    %1502 = vmatpush1.msra.mxu0 0.0
    %1503 = vmatprep.subr.mxu0 0.0
    %1504 = vmatpush1.msra.mxu0 0.0
    %1505 = vmatprep.subr.mxu0 0.0
    %1506 = vmatpush1.msra.mxu0 0.0
    %1507 = vmatprep.subr.mxu0 0.0
    %1508 = vmatpush1.msra.mxu0 0.0
    %1509 = vmatprep.subr.mxu0 0.0
    %1510 = vmatpush1.msra.mxu0 0.0
    %1511 = vmatprep.subr.mxu0 0.0
    %1512 = vmatpush1.msra.mxu0 0.0
    %1513 = vmatprep.subr.mxu0 0.0
    %1514 = vmatpush1.msra.mxu0 0.0
    %1515 = vmatprep.subr.mxu0 0.0
    %1516 = vmatpush1.msra.mxu0 0.0
    %1517 = vmatprep.subr.mxu0 0.0
    %1518 = vmatpush1.msra.mxu0 0.0
    %1519 = vmatprep.subr.mxu0 0.0
    %1520 = vmatpush1.msra.mxu0 0.0
    %1521 = vmatprep.mubr.f32.mxu0 0.0
    %1522 = vmatmul.mubr.f32.gmra.mrb[0].mxu0 %v1455
    %v1523 = vpop.f32.mrb[0].mxu0
    %v1524 = vadd.f32 0.0, %v1523
    %v1525 = vpop.f32.mrb[0].mxu0
    %1526 = vdwg.mxu0
    %s1527 = scalar_lea.vmem [#allocation2], 48
    %v1528 = vld [vmem:[%s1527] sm:$0xff]
    %v1529 = vadd.f32 %v1528, %v1447
    %v1530 = vadd.f32 %v199, %v1449
    %v1531 = vadd.f32 %v1530, %v1524
    %v1532 = vtanh.pop %v1529
    %v1533 = vxor.u32 %v1529, 2147483648
    %v1534 = vmul.f32 %v1533, 1.442695
    %v1535 = vpow.pop %v1534
    %v1536 = vadd.f32 %v1535, 1.0
    %v1537 = vrcp.pop %v1536
    %v1538 = vmul.f32 1.0, %v1537
    %v1539 = vsel %vm205, %v1532, %v1538
    %v1540 = vmul.f32 %v1539, %v1323
    %1542 = vrot.lane.b32.xlu0 %v1539, 64
    %v1543 = vpop.permute.xlu0 %1542
    %v1545 = vmul.f32 %v1539, %v1543
    %1547 = vrot.lane.b32.xlu0 %v1545, 32
    %v1548 = vpop.permute.xlu0 %1547
    %v1550 = vadd.f32 %v1540, %v1548
    %v1551 = vtanh.pop %v1550
    %1553 = vrot.lane.b32.xlu0 %v1551, 64
    %v1554 = vpop.permute.xlu0 %1553
    %v1556 = vmul.f32 %v1539, %v1554
    %v1557 = vtanh.pop %v1531
    %v1558 = vxor.u32 %v1531, 2147483648
    %v1559 = vmul.f32 %v1558, 1.442695
    %v1560 = vpow.pop %v1559
    %v1561 = vadd.f32 %v1560, 1.0
    %v1562 = vrcp.pop %v1561
    %v1563 = vmul.f32 1.0, %v1562
    %v1564 = vsel %vm205, %v1557, %v1563
    %v1565 = vmul.f32 %v1564, %v1348
    %1567 = vrot.lane.b32.xlu0 %v1564, 64
    %v1568 = vpop.permute.xlu0 %1567
    %v1570 = vmul.f32 %v1564, %v1568
    %1572 = vrot.lane.b32.xlu0 %v1570, 32
    %v1573 = vpop.permute.xlu0 %1572
    %v1575 = vadd.f32 %v1565, %v1573
    %v1576 = vtanh.pop %v1575
    %1578 = vrot.lane.b32.xlu0 %v1576, 64
    %v1579 = vpop.permute.xlu0 %1578
    %v1581 = vmul.f32 %v1564, %v1579
    %1583 = vrot.lane.b32.xlu0 %v1581, 32
    %v1584 = vpop.permute.xlu0 %1583
    %s1586 = scalar_lea.vmem %s6, 40
    %1587 = vst.msk [vmem:[%s1586] sm:$0xff] %vm243, %v1584
    %1589 = vrot.lane.b32.xlu0 %v1575, 96
    %v1590 = vpop.permute.xlu0 %1589
    %s1592 = scalar_lea.vmem %s7, 40
    %1593 = vst.msk [vmem:[%s1592] sm:$0xff] %vm243, %v1590
    %v1594 = vld [vmem:[%s3] sm:$0xff]
    %v1595 = vld [vmem:[%s3 + $0x8] sm:$0xff]
    %v1596 = vld [vmem:[%s3 + $0x10] sm:$0xff]
    %v1597 = vld [vmem:[%s3 + $0x18] sm:$0xff]
    %v1598 = vld [vmem:[%s3 + $0x20] sm:$0xff]
    %v1599 = vld [vmem:[%s3 + $0x28] sm:$0xff]
    %v1600 = vld [vmem:[%s3 + $0x30] sm:$0xff]
    %v1601 = vld [vmem:[%s3 + $0x38] sm:$0xff]
    %1603 = vrot.lane.b32.xlu0 %v1556, 32
    %v1604 = vpop.permute.xlu0 %1603
    %v1605 = vsel %vm243, %v1604, 0
    %1607 = vmatprep.subr.mxu0 %v1595
    %1608 = vmatpush1.msra.mxu0 %v1594
    %1609 = vmatprep.subr.mxu0 %v1597
    %1610 = vmatpush1.msra.mxu0 %v1596
    %1611 = vmatprep.subr.mxu0 %v1599
    %1612 = vmatpush1.msra.mxu0 %v1598
    %1613 = vmatprep.subr.mxu0 %v1601
    %1614 = vmatpush1.msra.mxu0 %v1600
    %1615 = vmatprep.subr.mxu0 0.0
    %1616 = vmatpush1.msra.mxu0 0.0
    %1617 = vmatprep.subr.mxu0 0.0
    %1618 = vmatpush1.msra.mxu0 0.0
    %1619 = vmatprep.subr.mxu0 0.0
    %1620 = vmatpush1.msra.mxu0 0.0
    %1621 = vmatprep.subr.mxu0 0.0
    %1622 = vmatpush1.msra.mxu0 0.0
    %1623 = vmatprep.subr.mxu0 0.0
    %1624 = vmatpush1.msra.mxu0 0.0
    %1625 = vmatprep.subr.mxu0 0.0
    %1626 = vmatpush1.msra.mxu0 0.0
    %1627 = vmatprep.subr.mxu0 0.0
    %1628 = vmatpush1.msra.mxu0 0.0
    %1629 = vmatprep.subr.mxu0 0.0
    %1630 = vmatpush1.msra.mxu0 0.0
    %1631 = vmatprep.subr.mxu0 0.0
    %1632 = vmatpush1.msra.mxu0 0.0
    %1633 = vmatprep.subr.mxu0 0.0
    %1634 = vmatpush1.msra.mxu0 0.0
    %1635 = vmatprep.subr.mxu0 0.0
    %1636 = vmatpush1.msra.mxu0 0.0
    %1637 = vmatprep.subr.mxu0 0.0
    %1638 = vmatpush1.msra.mxu0 0.0
    %1639 = vmatprep.subr.mxu0 0.0
    %1640 = vmatpush1.msra.mxu0 0.0
    %1641 = vmatprep.subr.mxu0 0.0
    %1642 = vmatpush1.msra.mxu0 0.0
    %1643 = vmatprep.subr.mxu0 0.0
    %1644 = vmatpush1.msra.mxu0 0.0
    %1645 = vmatprep.subr.mxu0 0.0
    %1646 = vmatpush1.msra.mxu0 0.0
    %1647 = vmatprep.subr.mxu0 0.0
    %1648 = vmatpush1.msra.mxu0 0.0
    %1649 = vmatprep.subr.mxu0 0.0
    %1650 = vmatpush1.msra.mxu0 0.0
    %1651 = vmatprep.subr.mxu0 0.0
    %1652 = vmatpush1.msra.mxu0 0.0
    %1653 = vmatprep.subr.mxu0 0.0
    %1654 = vmatpush1.msra.mxu0 0.0
    %1655 = vmatprep.subr.mxu0 0.0
    %1656 = vmatpush1.msra.mxu0 0.0
    %1657 = vmatprep.subr.mxu0 0.0
    %1658 = vmatpush1.msra.mxu0 0.0
    %1659 = vmatprep.subr.mxu0 0.0
    %1660 = vmatpush1.msra.mxu0 0.0
    %1661 = vmatprep.subr.mxu0 0.0
    %1662 = vmatpush1.msra.mxu0 0.0
    %1663 = vmatprep.subr.mxu0 0.0
    %1664 = vmatpush1.msra.mxu0 0.0
    %1665 = vmatprep.subr.mxu0 0.0
    %1666 = vmatpush1.msra.mxu0 0.0
    %1667 = vmatprep.subr.mxu0 0.0
    %1668 = vmatpush1.msra.mxu0 0.0
    %1669 = vmatprep.subr.mxu0 0.0
    %1670 = vmatpush1.msra.mxu0 0.0
    %1671 = vmatprep.mubr.f32.mxu0 0.0
    %1672 = vmatmul.mubr.f32.gmra.mrb[0].mxu0 %v1605
    %v1673 = vpop.f32.mrb[0].mxu0
    %v1674 = vadd.f32 0.0, %v1673
    %v1675 = vpop.f32.mrb[0].mxu0
    %v1676 = vadd.f32 0.0, %v1675
    %1677 = vdwg.mxu0
    %v1678 = vld [vmem:[#allocation3] sm:$0xff]
    %v1679 = vld [vmem:[#allocation3 + $0x8] sm:$0xff]
    %v1680 = vld [vmem:[#allocation3 + $0x10] sm:$0xff]
    %v1681 = vld [vmem:[#allocation3 + $0x18] sm:$0xff]
    %v1682 = vsel %vm243, %v1584, 0
    %1684 = vmatprep.subr.mxu0 0.0
    %1685 = vmatpush1.msra.mxu0 %v1678
    %1686 = vmatprep.subr.mxu0 0.0
    %1687 = vmatpush1.msra.mxu0 %v1679
    %1688 = vmatprep.subr.mxu0 0.0
    %1689 = vmatpush1.msra.mxu0 %v1680
    %1690 = vmatprep.subr.mxu0 0.0
    %1691 = vmatpush1.msra.mxu0 %v1681
    %1692 = vmatprep.subr.mxu0 0.0
    %1693 = vmatpush1.msra.mxu0 0.0
    %1694 = vmatprep.subr.mxu0 0.0
    %1695 = vmatpush1.msra.mxu0 0.0
    %1696 = vmatprep.subr.mxu0 0.0
    %1697 = vmatpush1.msra.mxu0 0.0
    %1698 = vmatprep.subr.mxu0 0.0
    %1699 = vmatpush1.msra.mxu0 0.0
    %1700 = vmatprep.subr.mxu0 0.0
    %1701 = vmatpush1.msra.mxu0 0.0
    %1702 = vmatprep.subr.mxu0 0.0
    %1703 = vmatpush1.msra.mxu0 0.0
    %1704 = vmatprep.subr.mxu0 0.0
    %1705 = vmatpush1.msra.mxu0 0.0
    %1706 = vmatprep.subr.mxu0 0.0
    %1707 = vmatpush1.msra.mxu0 0.0
    %1708 = vmatprep.subr.mxu0 0.0
    %1709 = vmatpush1.msra.mxu0 0.0
    %1710 = vmatprep.subr.mxu0 0.0
    %1711 = vmatpush1.msra.mxu0 0.0
    %1712 = vmatprep.subr.mxu0 0.0
    %1713 = vmatpush1.msra.mxu0 0.0
    %1714 = vmatprep.subr.mxu0 0.0
    %1715 = vmatpush1.msra.mxu0 0.0
    %1716 = vmatprep.subr.mxu0 0.0
    %1717 = vmatpush1.msra.mxu0 0.0
    %1718 = vmatprep.subr.mxu0 0.0
    %1719 = vmatpush1.msra.mxu0 0.0
    %1720 = vmatprep.subr.mxu0 0.0
    %1721 = vmatpush1.msra.mxu0 0.0
    %1722 = vmatprep.subr.mxu0 0.0
    %1723 = vmatpush1.msra.mxu0 0.0
    %1724 = vmatprep.subr.mxu0 0.0
    %1725 = vmatpush1.msra.mxu0 0.0
    %1726 = vmatprep.subr.mxu0 0.0
    %1727 = vmatpush1.msra.mxu0 0.0
    %1728 = vmatprep.subr.mxu0 0.0
    %1729 = vmatpush1.msra.mxu0 0.0
    %1730 = vmatprep.subr.mxu0 0.0
    %1731 = vmatpush1.msra.mxu0 0.0
    %1732 = vmatprep.subr.mxu0 0.0
    %1733 = vmatpush1.msra.mxu0 0.0
    %1734 = vmatprep.subr.mxu0 0.0
    %1735 = vmatpush1.msra.mxu0 0.0
    %1736 = vmatprep.subr.mxu0 0.0
    %1737 = vmatpush1.msra.mxu0 0.0
    %1738 = vmatprep.subr.mxu0 0.0
    %1739 = vmatpush1.msra.mxu0 0.0
    %1740 = vmatprep.subr.mxu0 0.0
    %1741 = vmatpush1.msra.mxu0 0.0
    %1742 = vmatprep.subr.mxu0 0.0
    %1743 = vmatpush1.msra.mxu0 0.0
    %1744 = vmatprep.subr.mxu0 0.0
    %1745 = vmatpush1.msra.mxu0 0.0
    %1746 = vmatprep.subr.mxu0 0.0
    %1747 = vmatpush1.msra.mxu0 0.0
    %1748 = vmatprep.mubr.f32.mxu0 0.0
    %1749 = vmatmul.mubr.f32.gmra.mrb[0].mxu0 %v1682
    %v1750 = vpop.f32.mrb[0].mxu0
    %v1751 = vadd.f32 0.0, %v1750
    %v1752 = vpop.f32.mrb[0].mxu0
    %1753 = vdwg.mxu0
    %s1754 = scalar_lea.vmem [#allocation2], 56
    %v1755 = vld [vmem:[%s1754] sm:$0xff]
    %v1756 = vadd.f32 %v1755, %v1674
    %v1757 = vadd.f32 %v199, %v1676
    %v1758 = vadd.f32 %v1757, %v1751
    %v1759 = vtanh.pop %v1756
    %v1760 = vxor.u32 %v1756, 2147483648
    %v1761 = vmul.f32 %v1760, 1.442695
    %v1762 = vpow.pop %v1761
    %v1763 = vadd.f32 %v1762, 1.0
    %v1764 = vrcp.pop %v1763
    %v1765 = vmul.f32 1.0, %v1764
    %v1766 = vsel %vm205, %v1759, %v1765
    %v1767 = vmul.f32 %v1766, %v1550
    %1769 = vrot.lane.b32.xlu0 %v1766, 64
    %v1770 = vpop.permute.xlu0 %1769
    %v1772 = vmul.f32 %v1766, %v1770
    %1774 = vrot.lane.b32.xlu0 %v1772, 32
    %v1775 = vpop.permute.xlu0 %1774
    %v1777 = vadd.f32 %v1767, %v1775
    %v1778 = vtanh.pop %v1777
    %1780 = vrot.lane.b32.xlu0 %v1778, 64
    %v1781 = vpop.permute.xlu0 %1780
    %v1783 = vmul.f32 %v1766, %v1781
    %v1784 = vtanh.pop %v1758
    %v1785 = vxor.u32 %v1758, 2147483648
    %v1786 = vmul.f32 %v1785, 1.442695
    %v1787 = vpow.pop %v1786
    %v1788 = vadd.f32 %v1787, 1.0
    %v1789 = vrcp.pop %v1788
    %v1790 = vmul.f32 1.0, %v1789
    %v1791 = vsel %vm205, %v1784, %v1790
    %v1792 = vmul.f32 %v1791, %v1575
    %1794 = vrot.lane.b32.xlu0 %v1791, 64
    %v1795 = vpop.permute.xlu0 %1794
    %v1797 = vmul.f32 %v1791, %v1795
    %1799 = vrot.lane.b32.xlu0 %v1797, 32
    %v1800 = vpop.permute.xlu0 %1799
    %v1802 = vadd.f32 %v1792, %v1800
    %v1803 = vtanh.pop %v1802
    %1805 = vrot.lane.b32.xlu0 %v1803, 64
    %v1806 = vpop.permute.xlu0 %1805
    %v1808 = vmul.f32 %v1791, %v1806
    %1810 = vrot.lane.b32.xlu0 %v1808, 32
    %v1811 = vpop.permute.xlu0 %1810
    %s1813 = scalar_lea.vmem %s6, 48
    %1814 = vst.msk [vmem:[%s1813] sm:$0xff] %vm243, %v1811
    %1816 = vrot.lane.b32.xlu0 %v1802, 96
    %v1817 = vpop.permute.xlu0 %1816
    %s1819 = scalar_lea.vmem %s7, 48
    %1820 = vst.msk [vmem:[%s1819] sm:$0xff] %vm243, %v1817
    %v1821 = vld [vmem:[%s3] sm:$0xff]
    %v1822 = vld [vmem:[%s3 + $0x8] sm:$0xff]
    %v1823 = vld [vmem:[%s3 + $0x10] sm:$0xff]
    %v1824 = vld [vmem:[%s3 + $0x18] sm:$0xff]
    %v1825 = vld [vmem:[%s3 + $0x20] sm:$0xff]
    %v1826 = vld [vmem:[%s3 + $0x28] sm:$0xff]
    %v1827 = vld [vmem:[%s3 + $0x30] sm:$0xff]
    %v1828 = vld [vmem:[%s3 + $0x38] sm:$0xff]
    %1830 = vrot.lane.b32.xlu0 %v1783, 32
    %v1831 = vpop.permute.xlu0 %1830
    %v1832 = vsel %vm243, %v1831, 0
    %1834 = vmatprep.subr.mxu0 %v1822
    %1835 = vmatpush1.msra.mxu0 %v1821
    %1836 = vmatprep.subr.mxu0 %v1824
    %1837 = vmatpush1.msra.mxu0 %v1823
    %1838 = vmatprep.subr.mxu0 %v1826
    %1839 = vmatpush1.msra.mxu0 %v1825
    %1840 = vmatprep.subr.mxu0 %v1828
    %1841 = vmatpush1.msra.mxu0 %v1827
    %1842 = vmatprep.subr.mxu0 0.0
    %1843 = vmatpush1.msra.mxu0 0.0
    %1844 = vmatprep.subr.mxu0 0.0
    %1845 = vmatpush1.msra.mxu0 0.0
    %1846 = vmatprep.subr.mxu0 0.0
    %1847 = vmatpush1.msra.mxu0 0.0
    %1848 = vmatprep.subr.mxu0 0.0
    %1849 = vmatpush1.msra.mxu0 0.0
    %1850 = vmatprep.subr.mxu0 0.0
    %1851 = vmatpush1.msra.mxu0 0.0
    %1852 = vmatprep.subr.mxu0 0.0
    %1853 = vmatpush1.msra.mxu0 0.0
    %1854 = vmatprep.subr.mxu0 0.0
    %1855 = vmatpush1.msra.mxu0 0.0
    %1856 = vmatprep.subr.mxu0 0.0
    %1857 = vmatpush1.msra.mxu0 0.0
    %1858 = vmatprep.subr.mxu0 0.0
    %1859 = vmatpush1.msra.mxu0 0.0
    %1860 = vmatprep.subr.mxu0 0.0
    %1861 = vmatpush1.msra.mxu0 0.0
    %1862 = vmatprep.subr.mxu0 0.0
    %1863 = vmatpush1.msra.mxu0 0.0
    %1864 = vmatprep.subr.mxu0 0.0
    %1865 = vmatpush1.msra.mxu0 0.0
    %1866 = vmatprep.subr.mxu0 0.0
    %1867 = vmatpush1.msra.mxu0 0.0
    %1868 = vmatprep.subr.mxu0 0.0
    %1869 = vmatpush1.msra.mxu0 0.0
    %1870 = vmatprep.subr.mxu0 0.0
    %1871 = vmatpush1.msra.mxu0 0.0
    %1872 = vmatprep.subr.mxu0 0.0
    %1873 = vmatpush1.msra.mxu0 0.0
    %1874 = vmatprep.subr.mxu0 0.0
    %1875 = vmatpush1.msra.mxu0 0.0
    %1876 = vmatprep.subr.mxu0 0.0
    %1877 = vmatpush1.msra.mxu0 0.0
    %1878 = vmatprep.subr.mxu0 0.0
    %1879 = vmatpush1.msra.mxu0 0.0
    %1880 = vmatprep.subr.mxu0 0.0
    %1881 = vmatpush1.msra.mxu0 0.0
    %1882 = vmatprep.subr.mxu0 0.0
    %1883 = vmatpush1.msra.mxu0 0.0
    %1884 = vmatprep.subr.mxu0 0.0
    %1885 = vmatpush1.msra.mxu0 0.0
    %1886 = vmatprep.subr.mxu0 0.0
    %1887 = vmatpush1.msra.mxu0 0.0
    %1888 = vmatprep.subr.mxu0 0.0
    %1889 = vmatpush1.msra.mxu0 0.0
    %1890 = vmatprep.subr.mxu0 0.0
    %1891 = vmatpush1.msra.mxu0 0.0
    %1892 = vmatprep.subr.mxu0 0.0
    %1893 = vmatpush1.msra.mxu0 0.0
    %1894 = vmatprep.subr.mxu0 0.0
    %1895 = vmatpush1.msra.mxu0 0.0
    %1896 = vmatprep.subr.mxu0 0.0
    %1897 = vmatpush1.msra.mxu0 0.0
    %1898 = vmatprep.mubr.f32.mxu0 0.0
    %1899 = vmatmul.mubr.f32.gmra.mrb[0].mxu0 %v1832
    %v1900 = vpop.f32.mrb[0].mxu0
    %v1901 = vpop.f32.mrb[0].mxu0
    %v1902 = vadd.f32 0.0, %v1901
    %1903 = vdwg.mxu0
    %v1904 = vld [vmem:[#allocation3] sm:$0xff]
    %v1905 = vld [vmem:[#allocation3 + $0x8] sm:$0xff]
    %v1906 = vld [vmem:[#allocation3 + $0x10] sm:$0xff]
    %v1907 = vld [vmem:[#allocation3 + $0x18] sm:$0xff]
    %v1908 = vsel %vm243, %v1811, 0
    %1910 = vmatprep.subr.mxu0 0.0
    %1911 = vmatpush1.msra.mxu0 %v1904
    %1912 = vmatprep.subr.mxu0 0.0
    %1913 = vmatpush1.msra.mxu0 %v1905
    %1914 = vmatprep.subr.mxu0 0.0
    %1915 = vmatpush1.msra.mxu0 %v1906
    %1916 = vmatprep.subr.mxu0 0.0
    %1917 = vmatpush1.msra.mxu0 %v1907
    %1918 = vmatprep.subr.mxu0 0.0
    %1919 = vmatpush1.msra.mxu0 0.0
    %1920 = vmatprep.subr.mxu0 0.0
    %1921 = vmatpush1.msra.mxu0 0.0
    %1922 = vmatprep.subr.mxu0 0.0
    %1923 = vmatpush1.msra.mxu0 0.0
    %1924 = vmatprep.subr.mxu0 0.0
    %1925 = vmatpush1.msra.mxu0 0.0
    %1926 = vmatprep.subr.mxu0 0.0
    %1927 = vmatpush1.msra.mxu0 0.0
    %1928 = vmatprep.subr.mxu0 0.0
    %1929 = vmatpush1.msra.mxu0 0.0
    %1930 = vmatprep.subr.mxu0 0.0
    %1931 = vmatpush1.msra.mxu0 0.0
    %1932 = vmatprep.subr.mxu0 0.0
    %1933 = vmatpush1.msra.mxu0 0.0
    %1934 = vmatprep.subr.mxu0 0.0
    %1935 = vmatpush1.msra.mxu0 0.0
    %1936 = vmatprep.subr.mxu0 0.0
    %1937 = vmatpush1.msra.mxu0 0.0
    %1938 = vmatprep.subr.mxu0 0.0
    %1939 = vmatpush1.msra.mxu0 0.0
    %1940 = vmatprep.subr.mxu0 0.0
    %1941 = vmatpush1.msra.mxu0 0.0
    %1942 = vmatprep.subr.mxu0 0.0
    %1943 = vmatpush1.msra.mxu0 0.0
    %1944 = vmatprep.subr.mxu0 0.0
    %1945 = vmatpush1.msra.mxu0 0.0
    %1946 = vmatprep.subr.mxu0 0.0
    %1947 = vmatpush1.msra.mxu0 0.0
    %1948 = vmatprep.subr.mxu0 0.0
    %1949 = vmatpush1.msra.mxu0 0.0
    %1950 = vmatprep.subr.mxu0 0.0
    %1951 = vmatpush1.msra.mxu0 0.0
    %1952 = vmatprep.subr.mxu0 0.0
    %1953 = vmatpush1.msra.mxu0 0.0
    %1954 = vmatprep.subr.mxu0 0.0
    %1955 = vmatpush1.msra.mxu0 0.0
    %1956 = vmatprep.subr.mxu0 0.0
    %1957 = vmatpush1.msra.mxu0 0.0
    %1958 = vmatprep.subr.mxu0 0.0
    %1959 = vmatpush1.msra.mxu0 0.0
    %1960 = vmatprep.subr.mxu0 0.0
    %1961 = vmatpush1.msra.mxu0 0.0
    %1962 = vmatprep.subr.mxu0 0.0
    %1963 = vmatpush1.msra.mxu0 0.0
    %1964 = vmatprep.subr.mxu0 0.0
    %1965 = vmatpush1.msra.mxu0 0.0
    %1966 = vmatprep.subr.mxu0 0.0
    %1967 = vmatpush1.msra.mxu0 0.0
    %1968 = vmatprep.subr.mxu0 0.0
    %1969 = vmatpush1.msra.mxu0 0.0
    %1970 = vmatprep.subr.mxu0 0.0
    %1971 = vmatpush1.msra.mxu0 0.0
    %1972 = vmatprep.subr.mxu0 0.0
    %1973 = vmatpush1.msra.mxu0 0.0
    %1974 = vmatprep.mubr.f32.mxu0 0.0
    %1975 = vmatmul.mubr.f32.gmra.mrb[0].mxu0 %v1908
    %v1976 = vpop.f32.mrb[0].mxu0
    %v1977 = vadd.f32 0.0, %v1976
    %v1978 = vpop.f32.mrb[0].mxu0
    %1979 = vdwg.mxu0
    %v1980 = vadd.f32 %v199, %v1902
    %v1981 = vadd.f32 %v1980, %v1977
    %v1982 = vtanh.pop %v1981
    %v1983 = vxor.u32 %v1981, 2147483648
    %v1984 = vmul.f32 %v1983, 1.442695
    %v1985 = vpow.pop %v1984
    %v1986 = vadd.f32 %v1985, 1.0
    %v1987 = vrcp.pop %v1986
    %v1988 = vmul.f32 1.0, %v1987
    %v1989 = vsel %vm205, %v1982, %v1988
    %v1990 = vmul.f32 %v1989, %v1802
    %1992 = vrot.lane.b32.xlu0 %v1989, 64
    %v1993 = vpop.permute.xlu0 %1992
    %v1995 = vmul.f32 %v1989, %v1993
    %1997 = vrot.lane.b32.xlu0 %v1995, 32
    %v1998 = vpop.permute.xlu0 %1997
    %v2000 = vadd.f32 %v1990, %v1998
    %v2001 = vtanh.pop %v2000
    %2003 = vrot.lane.b32.xlu0 %v2001, 64
    %v2004 = vpop.permute.xlu0 %2003
    %v2006 = vmul.f32 %v1989, %v2004
    %2008 = vrot.lane.b32.xlu0 %v2006, 32
    %v2009 = vpop.permute.xlu0 %2008
    %s2011 = scalar_lea.vmem %s6, 56
    %2012 = vst.msk [vmem:[%s2011] sm:$0xff] %vm243, %v2009
    %2014 = vrot.lane.b32.xlu0 %v2000, 96
    %v2015 = vpop.permute.xlu0 %2014
    %s2017 = scalar_lea.vmem %s7, 56
    %2018 = vst.msk [vmem:[%s2017] sm:$0xff] %vm243, %v2015
    // Predicated region
    $region30: #{tpu_custom_call.1} parent=1 // pred_check
      _
    $region31: #{tpu_custom_call.1} parent=1 // pred_check_branch
      %2020 = sbr.rel (0) target = $region33
    $region32: #{tpu_custom_call.1} parent=1 // pred_region
      _
    $region33: #{tpu_custom_call.1} parent=1 // pred_fallthru
      _
    // Predicated region
    $region34: #{tpu_custom_call.1} parent=1 // pred_check
      _
    $region35: #{tpu_custom_call.1} parent=1 // pred_check_branch
      %2022 = sbr.rel (0) target = $region37
    $region36: #{tpu_custom_call.1} parent=1 // pred_region
      _
    $region37: #{tpu_custom_call.1} parent=1 // pred_fallthru
      _
    // Predicated region
    $region38: #{tpu_custom_call.1} parent=1 // pred_check
      _
    $region39: #{tpu_custom_call.1} parent=1 // pred_check_branch
      %2024 = sbr.rel (0) target = $region41
    $region40: #{tpu_custom_call.1} parent=1 // pred_region
      _
    $region41: #{tpu_custom_call.1} parent=1 // pred_fallthru
      _
    // Predicated region
    $region42: #{tpu_custom_call.1} parent=1 // pred_check
      _
    $region43: #{tpu_custom_call.1} parent=1 // pred_check_branch
      %2026 = sbr.rel (0) target = $region45
    $region44: #{tpu_custom_call.1} parent=1 // pred_region
      _
    $region45: #{tpu_custom_call.1} parent=1 // pred_fallthru
      _
    %2027 = vsyncpa [#allocation4], 1

</llo_original>
